<compile_context>
chip_gen: v6e
topology: v6e:2x2x1
jax: 0.10.0
libtpu: 0.0.40
codegen_flags: <defaults>
</compile_context>

<pallas_src>
import math

import jax
import jax.numpy as jnp
from jax.experimental import pallas as pl
from jax.experimental.pallas import tpu as pltpu

_HI = jax.lax.Precision.HIGHEST


def _make_attn_kernel(n_head, d_k, max_span, span_ramp, scale):
    """Fused adaptive-span attention over one (batch, query-tile) block."""
    inv_ramp = 1.0 / float(span_ramp)
    soft_gain = float(max_span) * inv_ramp

    def kernel(geom_ref, span_ref, mask_ref, q_ref, k_ref, v_ref, o_ref):
        # geom_ref : SMEM (2,)   int32   -- [left, right] span window geometry
        # span_ref : SMEM (H,)   float32 -- learned per-head span sizes
        # mask_ref : VMEM (1,1,T) int32  -- key padding mask (1 = keep)
        # q_ref    : VMEM (1,tq,n_feat)  compute dtype
        # k_ref/v_ref : VMEM (1,T,n_feat) compute dtype
        # o_ref    : VMEM (1,tq,n_feat)  float32
        tq = q_ref.shape[1]
        tk = k_ref.shape[1]
        left = geom_ref[0]
        right = geom_ref[1]
        qi = pl.program_id(1)

        # ---- masks built in-register from iota + SMEM scalars (no HBM tables)
        rows = qi * tq + jax.lax.broadcasted_iota(jnp.int32, (tq, tk), 0)
        cols = jax.lax.broadcasted_iota(jnp.int32, (tq, tk), 1)
        rel = cols - rows                                     # key - query
        km = mask_ref[0] != 0                                 # (1, tk)
        keep = ((rel >= -left) & (rel <= right) & km).astype(jnp.float32)
        # head-independent part of the adaptive soft-span mask:
        #   soft_h = clip(base + span_h * max_span / ramp, 0, 1)
        base = (rel.astype(jnp.float32)
                + (float(span_ramp) - right.astype(jnp.float32))) * inv_ramp

        q_all = q_ref[0]
        q_all = q_all * jnp.asarray(scale, q_all.dtype)       # fold 1/sqrt(d_k)
        k_all = k_ref[0]
        v_all = v_ref[0]

        dn = (((1,), (1,)), ((), ()))                         # contract d_k
        for h in range(n_head):                               # small static H
            sl = slice(h * d_k, (h + 1) * d_k)
            # scores on the MXU, f32 accumulation
            s = jax.lax.dot_general(q_all[:, sl], k_all[:, sl], dn,
                                    preferred_element_type=jnp.float32)
            # shift-invariant exp; the shift cancels in the normalisation below
            m = jnp.max(s, axis=-1, keepdims=True)
            e = jnp.exp(s - m)
            w = e * keep                                      # masked weights
            soft = jnp.clip(base + span_ref[h] * soft_gain, 0.0, 1.0)
            num = w * soft
            # fused softmax + AdaptiveSpanMask renormalisation:
            #   p = (e*keep*soft) / (sum(e*keep*soft) + 1e-8*sum(e*keep))
            denom = (jnp.sum(num, axis=-1, keepdims=True)
                     + 1e-8 * jnp.sum(w, axis=-1, keepdims=True))
            inv = jnp.where(denom > 0.0,                      # fully-masked rows -> 0
                            pl.reciprocal(denom, approx=False), 0.0)
            p = (num * inv).astype(v_all.dtype)
            # TODO(synk): dropout on attention weights omitted (inference / p=0).
            o = jnp.dot(p, v_all[:, sl], preferred_element_type=jnp.float32)
            o_ref[0, :, sl] = o.astype(o_ref.dtype)

    return kernel


def _linear(x, w, b):
    """torch nn.Linear: y = x @ W^T + b, W is (out, in)."""
    return jnp.einsum("btf,of->bto", x, w, precision=_HI) + b


def multi_headed_attention_adaptive_span(query, key, value, mask, params, *,
                                         n_head, max_span, span_ramp,
                                         span_ratio,
                                         compute_dtype=jnp.bfloat16,
                                         q_tile=None):
    """Forward of espnet MultiHeadedAttentionAdaptiveSpan (inference)."""
    B, T, n_feat = query.shape
    assert key.shape == (B, T, n_feat) and value.shape == (B, T, n_feat)
    assert n_feat % n_head == 0
    d_k = n_feat // n_head
    scale = 1.0 / math.sqrt(d_k)

    # query-axis tile: biggest aligned tile <= 128 that divides T
    if q_tile is None:
        q_tile = T
        for cand in (128, 64, 32, 16):
            if cand < T and T % cand == 0:
                q_tile = cand
                break
    assert T % q_tile == 0
    nq = T // q_tile

    if mask is None:
        key_mask = jnp.ones((B, 1, T), jnp.int32)
    else:
        # TODO(synk): only (batch, 1, time) key-padding masks are fused; a full
        # (batch, time1, time2) mask would need per-query-row mask blocks.
        assert mask.shape == (B, 1, T), mask.shape
        key_mask = mask.astype(jnp.int32)

    in_bytes = jnp.dtype(compute_dtype).itemsize
    # VMEM budget: double-buffered q/k/v/mask/out blocks + elementwise scratch
    blk_bytes = 2 * ((q_tile + 2 * T) * n_feat * in_bytes
                     + q_tile * n_feat * 4 + 8 * 128 * 4)
    scratch_bytes = 12 * q_tile * T * 4
    vmem_limit = int(min(100 * 2 ** 20,
                         max(8 * 2 ** 20, 2 * (blk_bytes + scratch_bytes))))

    cost = pl.CostEstimate(
        flops=4 * B * T * T * n_feat,
        transcendentals=B * n_head * T * T,
        bytes_accessed=(3 * B * T * n_feat * in_bytes
                        + B * T * n_feat * 4 + B * T * 4))

    kernel = _make_attn_kernel(n_head, d_k, max_span, span_ramp, scale)

    def _core(key_mask, query, key, value, params):
        # span geometry, fully traced: no host sync, no recompile on span change
        span_p = params["span_size"].reshape(n_head).astype(jnp.float32)
        span_f = jnp.ceil(jnp.max(span_p) * max_span) + span_ramp
        span_i = jnp.clip(span_f, 0, max_span).astype(jnp.int32)
        left = (span_i.astype(jnp.float32) * span_ratio).astype(jnp.int32)
        right = span_i - left - 1
        geom = jnp.stack([left, right]).astype(jnp.int32)

        # projections (dense GEMMs handled by XLA); cast once for bf16 MXU feeds
        q = _linear(query, params["wq"], params["bq"]).astype(compute_dtype)
        k = _linear(key, params["wk"], params["bk"]).astype(compute_dtype)
        v = _linear(value, params["wv"], params["bv"]).astype(compute_dtype)
        # q/k/v stay in (B, T, n_feat); heads are sliced inside the kernel, so
        # there is no (B,T,H,D)->(B,H,T,D) HBM transpose pass before the call.

        ctx = pl.pallas_call(
            kernel,
            out_shape=jax.ShapeDtypeStruct((B, T, n_feat), jnp.float32),
            grid_spec=pltpu.PrefetchScalarGridSpec(
                num_scalar_prefetch=2,
                grid=(B, nq),
                in_specs=[
                    pl.BlockSpec((1, 1, T), lambda b, i, g, s: (b, 0, 0)),
                    pl.BlockSpec((1, q_tile, n_feat),
                                 lambda b, i, g, s: (b, i, 0)),
                    pl.BlockSpec((1, T, n_feat), lambda b, i, g, s: (b, 0, 0)),
                    pl.BlockSpec((1, T, n_feat), lambda b, i, g, s: (b, 0, 0)),
                ],
                out_specs=pl.BlockSpec((1, q_tile, n_feat),
                                       lambda b, i, g, s: (b, i, 0)),
            ),
            compiler_params=pltpu.CompilerParams(
                dimension_semantics=("parallel", "parallel"),
                vmem_limit_bytes=vmem_limit),
            cost_estimate=cost,
        )(geom, span_p, key_mask, q, k, v)

        # context already in (B, T, n_feat): no post-kernel transpose pass
        return _linear(ctx, params["wo"], params["bo"])

    return jax.jit(_core)(key_mask, query, key, value, params)


def _reference_forward(query, key, value, mask, params, *, n_head, max_span,
                       span_ramp, span_ratio):
    """Pure-JAX transliteration of the torch forward (pad + unfold windows)."""
    B, T, n_feat = query.shape
    d_k = n_feat // n_head
    neg = float(jnp.finfo(jnp.float32).min)

    q = _linear(query, params["wq"], params["bq"]).reshape(
        B, T, n_head, d_k).transpose(0, 2, 1, 3)
    k = _linear(key, params["wk"], params["bk"]).reshape(
        B, T, n_head, d_k).transpose(0, 2, 1, 3)
    v = _linear(value, params["wv"], params["bv"]).reshape(
        B, T, n_head, d_k).transpose(0, 2, 1, 3)

    span_param = params["span_size"].reshape(n_head).astype(jnp.float32)
    span = math.ceil(float(jnp.max(span_param)) * max_span) + span_ramp
    span = max(0, min(max_span, span))
    left = int(span * span_ratio)
    right = span - left - 1

    k_pad = jnp.pad(k, ((0, 0), (0, 0), (left, right), (0, 0)))
    v_pad = jnp.pad(v, ((0, 0), (0, 0), (left, right), (0, 0)))
    win = jnp.arange(T)[:, None] + jnp.arange(span)[None, :]       # (T, span)
    k_win = k_pad[:, :, win, :]                                    # (B,H,T,S,D)
    v_win = v_pad[:, :, win, :]

    scores = jnp.einsum("bhtd,bhtsd->bhts", q, k_win,
                        precision=_HI) / math.sqrt(d_k)

    if mask.shape[1] == 1:
        mask = jnp.broadcast_to(mask, (B, T, mask.shape[-1]))
    mask_pad = jnp.pad((mask != 0).astype(jnp.float32),
                       ((0, 0), (0, 0), (left, right)))
    mask_win = mask_pad[:, jnp.arange(T)[:, None], win]            # (B,T,S)
    invalid = (mask_win == 0.0)[:, None, :, :]                     # (B,1,T,S)

    scores = jnp.where(invalid, neg, scores)
    attn = jax.nn.softmax(scores, axis=-1)
    attn = jnp.where(invalid, 0.0, attn)

    template = jnp.linspace(1.0 - max_span, 0.0, max_span)
    soft = template[None, None, :] + span_param[:, None, None] * max_span
    soft = jnp.clip(soft / span_ramp + 1.0, 0.0, 1.0)              # (H,1,M)
    if span < max_span:
        soft = soft[:, :, max_span - span:]
    attn = attn * soft[None]
    attn = attn / (attn.sum(-1, keepdims=True) + 1e-8)

    x = jnp.einsum("bhts,bhtsd->bhtd", attn, v_win, precision=_HI)
    x = x.transpose(0, 2, 1, 3).reshape(B, T, n_feat)
    return _linear(x, params["wo"], params["bo"])


if __name__ == "__main__":
    B, T, n_head, n_feat = 2, 32, 4, 32
    max_span, span_ramp, span_ratio = 16, 2, 0.5

    root = jax.random.PRNGKey(0)
    ks = jax.random.split(root, 12)
    wscale = 1.0 / math.sqrt(n_feat)
    params = {
        "wq": jax.random.normal(ks[0], (n_feat, n_feat), jnp.float32) * wscale,
        "bq": jax.random.normal(ks[1], (n_feat,), jnp.float32) * 0.1,
        "wk": jax.random.normal(ks[2], (n_feat, n_feat), jnp.float32) * wscale,
        "bk": jax.random.normal(ks[3], (n_feat,), jnp.float32) * 0.1,
        "wv": jax.random.normal(ks[4], (n_feat, n_feat), jnp.float32) * wscale,
        "bv": jax.random.normal(ks[5], (n_feat,), jnp.float32) * 0.1,
        "wo": jax.random.normal(ks[6], (n_feat, n_feat), jnp.float32) * wscale,
        "bo": jax.random.normal(ks[7], (n_feat,), jnp.float32) * 0.1,
        # per-head learned span sizes (within clamp_param range [0.3, 1])
        "span_size": jnp.array([0.3, 0.45, 0.55, 0.6],
                               jnp.float32).reshape(n_head, 1, 1),
    }

    query = jax.random.normal(ks[8], (B, T, n_feat), jnp.float32)
    key_t = jax.random.normal(ks[9], (B, T, n_feat), jnp.float32)
    value = jax.random.normal(ks[10], (B, T, n_feat), jnp.float32)
    lengths = jnp.array([T, 23])
    mask = (jnp.arange(T)[None, None, :] < lengths[:, None, None]
            ).astype(jnp.int32)                                    # (B, 1, T)

    ref = _reference_forward(
        query, key_t, value, mask, params, n_head=n_head,
        max_span=max_span, span_ramp=span_ramp, span_ratio=span_ratio)

    # 1) exact-semantics check: f32 MXU operands, tight tolerance
    out_f32 = multi_headed_attention_adaptive_span(
        query, key_t, value, mask, params, n_head=n_head,
        max_span=max_span, span_ramp=span_ramp, span_ratio=span_ratio,
        compute_dtype=jnp.float32, q_tile=16)
    out_f32 = jax.block_until_ready(out_f32)
    assert out_f32.shape == (B, T, n_feat) and out_f32.dtype == jnp.float32
    err_f32 = float(jnp.max(jnp.abs(out_f32 - ref)))
    assert jnp.allclose(out_f32, ref, atol=2e-4, rtol=2e-4), err_f32

    # 2) fast config from the perf review: bf16 MXU operands (softmax in f32);
    #    checked at bf16-level tolerance (sanity, not bit accuracy).
    out_bf16 = multi_headed_attention_adaptive_span(
        query, key_t, value, mask, params, n_head=n_head,
        max_span=max_span, span_ramp=span_ramp, span_ratio=span_ratio,
        compute_dtype=jnp.bfloat16, q_tile=16)
    out_bf16 = jax.block_until_ready(out_bf16)
    err_bf16 = float(jnp.max(jnp.abs(out_bf16 - ref)))
    assert jnp.allclose(out_bf16, ref, atol=8e-2, rtol=5e-2), err_bf16

    print("KERNEL_OK")
</pallas_src>

<mosaic_0001>
module attributes {stable_mosaic.version = 11 : i64} {
  func.func @kernel(%arg0: i32, %arg1: i32, %arg2: memref<2xi32, #tpu.memory_space<smem>>, %arg3: memref<4xf32, #tpu.memory_space<smem>>, %arg4: memref<1x1x32xi32, #tpu.memory_space<vmem>>, %arg5: memref<1x16x32xf32, #tpu.memory_space<vmem>>, %arg6: memref<1x32x32xf32, #tpu.memory_space<vmem>>, %arg7: memref<1x32x32xf32, #tpu.memory_space<vmem>>, %arg8: memref<1x16x32xf32, #tpu.memory_space<vmem>>) attributes {dimension_semantics = [#tpu.dimension_semantics<parallel>, #tpu.dimension_semantics<parallel>], iteration_bounds = array<i64: 2, 2>, scalar_prefetch = 2 : i64, scratch_operands = 0 : i64, tpu.core_type = #tpu.core_type<tc>, window_params = [{transform_indices = @transform_0, window_bounds = array<i64: 1, 1, 32>}, {transform_indices = @transform_1, window_bounds = array<i64: 1, 16, 32>}, {transform_indices = @transform_2, window_bounds = array<i64: 1, 32, 32>}, {transform_indices = @transform_3, window_bounds = array<i64: 1, 32, 32>}, {transform_indices = @transform_4, window_bounds = array<i64: 1, 16, 32>}]} {
    %c0 = arith.constant 0 : index
    %0 = memref.load %arg2[%c0] : memref<2xi32, #tpu.memory_space<smem>>
    %c1 = arith.constant 1 : index
    %1 = memref.load %arg2[%c1] : memref<2xi32, #tpu.memory_space<smem>>
    %c16_i32 = arith.constant 16 : i32
    %2 = arith.muli %arg1, %c16_i32 : i32
    %3 = tpu.iota {dimensions = array<i32: 0>} : vector<16x32xi32>
    %4 = vector.broadcast %2 : i32 to vector<16x32xi32>
    %5 = arith.addi %4, %3 : vector<16x32xi32>
    %6 = tpu.iota {dimensions = array<i32: 1>} : vector<16x32xi32>
    %7 = arith.subi %6, %5 : vector<16x32xi32>
    %c0_0 = arith.constant 0 : index
    %c0_1 = arith.constant 0 : index
    %c0_2 = arith.constant 0 : index
    %8 = vector.load %arg4[%c0_0, %c0_1, %c0_2] : memref<1x1x32xi32, #tpu.memory_space<vmem>>, vector<1x1x32xi32>
    %9 = vector.shape_cast %8 : vector<1x1x32xi32> to vector<1x32xi32>
    %c0_i32 = arith.constant 0 : i32
    %10 = vector.broadcast %c0_i32 : i32 to vector<1x32xi32>
    %11 = arith.cmpi ne, %9, %10 : vector<1x32xi32>
    %c0_i32_3 = arith.constant 0 : i32
    %12 = arith.subi %c0_i32_3, %0 : i32
    %13 = vector.broadcast %12 : i32 to vector<16x32xi32>
    %14 = arith.cmpi sge, %7, %13 : vector<16x32xi32>
    %15 = vector.broadcast %1 : i32 to vector<16x32xi32>
    %16 = arith.cmpi sle, %7, %15 : vector<16x32xi32>
    %17 = arith.andi %14, %16 : vector<16x32xi1>
    %18 = vector.broadcast %11 : vector<1x32xi1> to vector<16x32xi1>
    %19 = arith.andi %17, %18 : vector<16x32xi1>
    %20 = arith.extui %19 : vector<16x32xi1> to vector<16x32xi32>
    %21 = arith.sitofp %20 : vector<16x32xi32> to vector<16x32xf32>
    %22 = arith.sitofp %7 : vector<16x32xi32> to vector<16x32xf32>
    %23 = arith.sitofp %1 : i32 to f32
    %cst = arith.constant 2.000000e+00 : f32
    %24 = arith.subf %cst, %23 : f32
    %25 = vector.broadcast %24 : f32 to vector<16x32xf32>
    %26 = arith.addf %22, %25 : vector<16x32xf32>
    %cst_4 = arith.constant 5.000000e-01 : f32
    %27 = vector.broadcast %cst_4 : f32 to vector<16x32xf32>
    %28 = arith.mulf %26, %27 : vector<16x32xf32>
    %c0_5 = arith.constant 0 : index
    %c0_6 = arith.constant 0 : index
    %c0_7 = arith.constant 0 : index
    %29 = vector.load %arg5[%c0_5, %c0_6, %c0_7] : memref<1x16x32xf32, #tpu.memory_space<vmem>>, vector<1x16x32xf32>
    %30 = vector.shape_cast %29 : vector<1x16x32xf32> to vector<16x32xf32>
    %cst_8 = arith.constant 0.353553385 : f32
    %31 = vector.broadcast %cst_8 : f32 to vector<16x32xf32>
    %32 = arith.mulf %30, %31 : vector<16x32xf32>
    %c0_9 = arith.constant 0 : index
    %c0_10 = arith.constant 0 : index
    %c0_11 = arith.constant 0 : index
    %33 = vector.load %arg6[%c0_9, %c0_10, %c0_11] : memref<1x32x32xf32, #tpu.memory_space<vmem>>, vector<1x32x32xf32>
    %34 = vector.shape_cast %33 : vector<1x32x32xf32> to vector<32x32xf32>
    %c0_12 = arith.constant 0 : index
    %c0_13 = arith.constant 0 : index
    %c0_14 = arith.constant 0 : index
    %35 = vector.load %arg7[%c0_12, %c0_13, %c0_14] : memref<1x32x32xf32, #tpu.memory_space<vmem>>, vector<1x32x32xf32>
    %36 = vector.shape_cast %35 : vector<1x32x32xf32> to vector<32x32xf32>
    %37 = vector.extract_strided_slice %32 {offsets = [0, 0], sizes = [16, 8], strides = [1, 1]} : vector<16x32xf32> to vector<16x8xf32>
    %38 = vector.extract_strided_slice %34 {offsets = [0, 0], sizes = [32, 8], strides = [1, 1]} : vector<32x32xf32> to vector<32x8xf32>
    %cst_15 = arith.constant dense<0.000000e+00> : vector<16x32xf32>
    %39 = tpu.matmul %37, %38, %cst_15 {dimension_numbers = #tpu.dot_dimension_numbers<[1], [1], [0], [0], [0, 0, 1, 0], [], []>} : vector<16x8xf32>, vector<32x8xf32>, vector<16x32xf32> -> vector<16x32xf32>
    %cst_16 = arith.constant dense<0xFF800000> : vector<16xf32>
    %40 = vector.multi_reduction <maximumf>, %39, %cst_16 [1] : vector<16x32xf32> to vector<16xf32>
    %41 = vector.shape_cast %40 : vector<16xf32> to vector<16x1xf32>
    %42 = vector.broadcast %41 : vector<16x1xf32> to vector<16x32xf32>
    %43 = arith.subf %39, %42 : vector<16x32xf32>
    %44 = math.exp %43 : vector<16x32xf32>
    %45 = arith.mulf %44, %21 : vector<16x32xf32>
    %c0_17 = arith.constant 0 : index
    %46 = memref.load %arg3[%c0_17] : memref<4xf32, #tpu.memory_space<smem>>
    %cst_18 = arith.constant 8.000000e+00 : f32
    %47 = arith.mulf %46, %cst_18 : f32
    %48 = vector.broadcast %47 : f32 to vector<16x32xf32>
    %49 = arith.addf %28, %48 : vector<16x32xf32>
    %cst_19 = arith.constant 0.000000e+00 : f32
    %cst_20 = arith.constant 1.000000e+00 : f32
    %50 = vector.broadcast %cst_19 : f32 to vector<16x32xf32>
    %51 = arith.maximumf %50, %49 : vector<16x32xf32>
    %52 = vector.broadcast %cst_20 : f32 to vector<16x32xf32>
    %53 = arith.minimumf %52, %51 : vector<16x32xf32>
    %54 = arith.mulf %45, %53 : vector<16x32xf32>
    %cst_21 = arith.constant dense<0.000000e+00> : vector<16xf32>
    %55 = vector.multi_reduction <add>, %54, %cst_21 [1] : vector<16x32xf32> to vector<16xf32>
    %56 = vector.shape_cast %55 : vector<16xf32> to vector<16x1xf32>
    %cst_22 = arith.constant dense<0.000000e+00> : vector<16xf32>
    %57 = vector.multi_reduction <add>, %45, %cst_22 [1] : vector<16x32xf32> to vector<16xf32>
    %58 = vector.shape_cast %57 : vector<16xf32> to vector<16x1xf32>
    %cst_23 = arith.constant 9.99999993E-9 : f32
    %59 = vector.broadcast %cst_23 : f32 to vector<16x1xf32>
    %60 = arith.mulf %59, %58 : vector<16x1xf32>
    %61 = arith.addf %56, %60 : vector<16x1xf32>
    %cst_24 = arith.constant 0.000000e+00 : f32
    %62 = vector.broadcast %cst_24 : f32 to vector<16x1xf32>
    %63 = arith.cmpf ogt, %61, %62 : vector<16x1xf32>
    %64 = tpu.reciprocal %61 : vector<16x1xf32> -> vector<16x1xf32>
    %cst_25 = arith.constant 0.000000e+00 : f32
    %65 = vector.broadcast %cst_25 : f32 to vector<16x1xf32>
    %66 = arith.select %63, %64, %65 : vector<16x1xi1>, vector<16x1xf32>
    %67 = vector.broadcast %66 : vector<16x1xf32> to vector<16x32xf32>
    %68 = arith.mulf %54, %67 : vector<16x32xf32>
    %69 = vector.extract_strided_slice %36 {offsets = [0, 0], sizes = [32, 8], strides = [1, 1]} : vector<32x32xf32> to vector<32x8xf32>
    %cst_26 = arith.constant dense<0.000000e+00> : vector<16x8xf32>
    %70 = tpu.matmul %68, %69, %cst_26 {dimension_numbers = #tpu.dot_dimension_numbers<[1], [0], [0], [1], [0, 0, 1, 1], [], []>} : vector<16x32xf32>, vector<32x8xf32>, vector<16x8xf32> -> vector<16x8xf32>
    %c0_27 = arith.constant 0 : index
    %c0_28 = arith.constant 0 : index
    %c0_29 = arith.constant 0 : index
    %71 = vector.load %arg8[%c0_27, %c0_28, %c0_29] : memref<1x16x32xf32, #tpu.memory_space<vmem>>, vector<1x16x8xf32>
    %72 = vector.shape_cast %71 : vector<1x16x8xf32> to vector<16x8xf32>
    %73 = vector.shape_cast %70 : vector<16x8xf32> to vector<1x16x8xf32>
    tpu.vector_store %arg8[%c0_27, %c0_28, %c0_29], %73 {strides = array<i32>} : memref<1x16x32xf32, #tpu.memory_space<vmem>>, vector<1x16x8xf32>,
    %74 = vector.extract_strided_slice %32 {offsets = [0, 8], sizes = [16, 8], strides = [1, 1]} : vector<16x32xf32> to vector<16x8xf32>
    %75 = vector.extract_strided_slice %34 {offsets = [0, 8], sizes = [32, 8], strides = [1, 1]} : vector<32x32xf32> to vector<32x8xf32>
    %cst_30 = arith.constant dense<0.000000e+00> : vector<16x32xf32>
    %76 = tpu.matmul %74, %75, %cst_30 {dimension_numbers = #tpu.dot_dimension_numbers<[1], [1], [0], [0], [0, 0, 1, 0], [], []>} : vector<16x8xf32>, vector<32x8xf32>, vector<16x32xf32> -> vector<16x32xf32>
    %cst_31 = arith.constant dense<0xFF800000> : vector<16xf32>
    %77 = vector.multi_reduction <maximumf>, %76, %cst_31 [1] : vector<16x32xf32> to vector<16xf32>
    %78 = vector.shape_cast %77 : vector<16xf32> to vector<16x1xf32>
    %79 = vector.broadcast %78 : vector<16x1xf32> to vector<16x32xf32>
    %80 = arith.subf %76, %79 : vector<16x32xf32>
    %81 = math.exp %80 : vector<16x32xf32>
    %82 = arith.mulf %81, %21 : vector<16x32xf32>
    %c1_32 = arith.constant 1 : index
    %83 = memref.load %arg3[%c1_32] : memref<4xf32, #tpu.memory_space<smem>>
    %cst_33 = arith.constant 8.000000e+00 : f32
    %84 = arith.mulf %83, %cst_33 : f32
    %85 = vector.broadcast %84 : f32 to vector<16x32xf32>
    %86 = arith.addf %28, %85 : vector<16x32xf32>
    %cst_34 = arith.constant 0.000000e+00 : f32
    %cst_35 = arith.constant 1.000000e+00 : f32
    %87 = vector.broadcast %cst_34 : f32 to vector<16x32xf32>
    %88 = arith.maximumf %87, %86 : vector<16x32xf32>
    %89 = vector.broadcast %cst_35 : f32 to vector<16x32xf32>
    %90 = arith.minimumf %89, %88 : vector<16x32xf32>
    %91 = arith.mulf %82, %90 : vector<16x32xf32>
    %cst_36 = arith.constant dense<0.000000e+00> : vector<16xf32>
    %92 = vector.multi_reduction <add>, %91, %cst_36 [1] : vector<16x32xf32> to vector<16xf32>
    %93 = vector.shape_cast %92 : vector<16xf32> to vector<16x1xf32>
    %cst_37 = arith.constant dense<0.000000e+00> : vector<16xf32>
    %94 = vector.multi_reduction <add>, %82, %cst_37 [1] : vector<16x32xf32> to vector<16xf32>
    %95 = vector.shape_cast %94 : vector<16xf32> to vector<16x1xf32>
    %cst_38 = arith.constant 9.99999993E-9 : f32
    %96 = vector.broadcast %cst_38 : f32 to vector<16x1xf32>
    %97 = arith.mulf %96, %95 : vector<16x1xf32>
    %98 = arith.addf %93, %97 : vector<16x1xf32>
    %cst_39 = arith.constant 0.000000e+00 : f32
    %99 = vector.broadcast %cst_39 : f32 to vector<16x1xf32>
    %100 = arith.cmpf ogt, %98, %99 : vector<16x1xf32>
    %101 = tpu.reciprocal %98 : vector<16x1xf32> -> vector<16x1xf32>
    %cst_40 = arith.constant 0.000000e+00 : f32
    %102 = vector.broadcast %cst_40 : f32 to vector<16x1xf32>
    %103 = arith.select %100, %101, %102 : vector<16x1xi1>, vector<16x1xf32>
    %104 = vector.broadcast %103 : vector<16x1xf32> to vector<16x32xf32>
    %105 = arith.mulf %91, %104 : vector<16x32xf32>
    %106 = vector.extract_strided_slice %36 {offsets = [0, 8], sizes = [32, 8], strides = [1, 1]} : vector<32x32xf32> to vector<32x8xf32>
    %cst_41 = arith.constant dense<0.000000e+00> : vector<16x8xf32>
    %107 = tpu.matmul %105, %106, %cst_41 {dimension_numbers = #tpu.dot_dimension_numbers<[1], [0], [0], [1], [0, 0, 1, 1], [], []>} : vector<16x32xf32>, vector<32x8xf32>, vector<16x8xf32> -> vector<16x8xf32>
    %c0_42 = arith.constant 0 : index
    %c0_43 = arith.constant 0 : index
    %c8 = arith.constant 8 : index
    %108 = vector.load %arg8[%c0_42, %c0_43, %c8] : memref<1x16x32xf32, #tpu.memory_space<vmem>>, vector<1x16x8xf32>
    %109 = vector.shape_cast %108 : vector<1x16x8xf32> to vector<16x8xf32>
    %110 = vector.shape_cast %107 : vector<16x8xf32> to vector<1x16x8xf32>
    tpu.vector_store %arg8[%c0_42, %c0_43, %c8], %110 {strides = array<i32>} : memref<1x16x32xf32, #tpu.memory_space<vmem>>, vector<1x16x8xf32>,
    %111 = vector.extract_strided_slice %32 {offsets = [0, 16], sizes = [16, 8], strides = [1, 1]} : vector<16x32xf32> to vector<16x8xf32>
    %112 = vector.extract_strided_slice %34 {offsets = [0, 16], sizes = [32, 8], strides = [1, 1]} : vector<32x32xf32> to vector<32x8xf32>
    %cst_44 = arith.constant dense<0.000000e+00> : vector<16x32xf32>
    %113 = tpu.matmul %111, %112, %cst_44 {dimension_numbers = #tpu.dot_dimension_numbers<[1], [1], [0], [0], [0, 0, 1, 0], [], []>} : vector<16x8xf32>, vector<32x8xf32>, vector<16x32xf32> -> vector<16x32xf32>
    %cst_45 = arith.constant dense<0xFF800000> : vector<16xf32>
    %114 = vector.multi_reduction <maximumf>, %113, %cst_45 [1] : vector<16x32xf32> to vector<16xf32>
    %115 = vector.shape_cast %114 : vector<16xf32> to vector<16x1xf32>
    %116 = vector.broadcast %115 : vector<16x1xf32> to vector<16x32xf32>
    %117 = arith.subf %113, %116 : vector<16x32xf32>
    %118 = math.exp %117 : vector<16x32xf32>
    %119 = arith.mulf %118, %21 : vector<16x32xf32>
    %c2 = arith.constant 2 : index
    %120 = memref.load %arg3[%c2] : memref<4xf32, #tpu.memory_space<smem>>
    %cst_46 = arith.constant 8.000000e+00 : f32
    %121 = arith.mulf %120, %cst_46 : f32
    %122 = vector.broadcast %121 : f32 to vector<16x32xf32>
    %123 = arith.addf %28, %122 : vector<16x32xf32>
    %cst_47 = arith.constant 0.000000e+00 : f32
    %cst_48 = arith.constant 1.000000e+00 : f32
    %124 = vector.broadcast %cst_47 : f32 to vector<16x32xf32>
    %125 = arith.maximumf %124, %123 : vector<16x32xf32>
    %126 = vector.broadcast %cst_48 : f32 to vector<16x32xf32>
    %127 = arith.minimumf %126, %125 : vector<16x32xf32>
    %128 = arith.mulf %119, %127 : vector<16x32xf32>
    %cst_49 = arith.constant dense<0.000000e+00> : vector<16xf32>
    %129 = vector.multi_reduction <add>, %128, %cst_49 [1] : vector<16x32xf32> to vector<16xf32>
    %130 = vector.shape_cast %129 : vector<16xf32> to vector<16x1xf32>
    %cst_50 = arith.constant dense<0.000000e+00> : vector<16xf32>
    %131 = vector.multi_reduction <add>, %119, %cst_50 [1] : vector<16x32xf32> to vector<16xf32>
    %132 = vector.shape_cast %131 : vector<16xf32> to vector<16x1xf32>
    %cst_51 = arith.constant 9.99999993E-9 : f32
    %133 = vector.broadcast %cst_51 : f32 to vector<16x1xf32>
    %134 = arith.mulf %133, %132 : vector<16x1xf32>
    %135 = arith.addf %130, %134 : vector<16x1xf32>
    %cst_52 = arith.constant 0.000000e+00 : f32
    %136 = vector.broadcast %cst_52 : f32 to vector<16x1xf32>
    %137 = arith.cmpf ogt, %135, %136 : vector<16x1xf32>
    %138 = tpu.reciprocal %135 : vector<16x1xf32> -> vector<16x1xf32>
    %cst_53 = arith.constant 0.000000e+00 : f32
    %139 = vector.broadcast %cst_53 : f32 to vector<16x1xf32>
    %140 = arith.select %137, %138, %139 : vector<16x1xi1>, vector<16x1xf32>
    %141 = vector.broadcast %140 : vector<16x1xf32> to vector<16x32xf32>
    %142 = arith.mulf %128, %141 : vector<16x32xf32>
    %143 = vector.extract_strided_slice %36 {offsets = [0, 16], sizes = [32, 8], strides = [1, 1]} : vector<32x32xf32> to vector<32x8xf32>
    %cst_54 = arith.constant dense<0.000000e+00> : vector<16x8xf32>
    %144 = tpu.matmul %142, %143, %cst_54 {dimension_numbers = #tpu.dot_dimension_numbers<[1], [0], [0], [1], [0, 0, 1, 1], [], []>} : vector<16x32xf32>, vector<32x8xf32>, vector<16x8xf32> -> vector<16x8xf32>
    %c0_55 = arith.constant 0 : index
    %c0_56 = arith.constant 0 : index
    %c16 = arith.constant 16 : index
    %145 = vector.load %arg8[%c0_55, %c0_56, %c16] : memref<1x16x32xf32, #tpu.memory_space<vmem>>, vector<1x16x8xf32>
    %146 = vector.shape_cast %145 : vector<1x16x8xf32> to vector<16x8xf32>
    %147 = vector.shape_cast %144 : vector<16x8xf32> to vector<1x16x8xf32>
    tpu.vector_store %arg8[%c0_55, %c0_56, %c16], %147 {strides = array<i32>} : memref<1x16x32xf32, #tpu.memory_space<vmem>>, vector<1x16x8xf32>,
    %148 = vector.extract_strided_slice %32 {offsets = [0, 24], sizes = [16, 8], strides = [1, 1]} : vector<16x32xf32> to vector<16x8xf32>
    %149 = vector.extract_strided_slice %34 {offsets = [0, 24], sizes = [32, 8], strides = [1, 1]} : vector<32x32xf32> to vector<32x8xf32>
    %cst_57 = arith.constant dense<0.000000e+00> : vector<16x32xf32>
    %150 = tpu.matmul %148, %149, %cst_57 {dimension_numbers = #tpu.dot_dimension_numbers<[1], [1], [0], [0], [0, 0, 1, 0], [], []>} : vector<16x8xf32>, vector<32x8xf32>, vector<16x32xf32> -> vector<16x32xf32>
    %cst_58 = arith.constant dense<0xFF800000> : vector<16xf32>
    %151 = vector.multi_reduction <maximumf>, %150, %cst_58 [1] : vector<16x32xf32> to vector<16xf32>
    %152 = vector.shape_cast %151 : vector<16xf32> to vector<16x1xf32>
    %153 = vector.broadcast %152 : vector<16x1xf32> to vector<16x32xf32>
    %154 = arith.subf %150, %153 : vector<16x32xf32>
    %155 = math.exp %154 : vector<16x32xf32>
    %156 = arith.mulf %155, %21 : vector<16x32xf32>
    %c3 = arith.constant 3 : index
    %157 = memref.load %arg3[%c3] : memref<4xf32, #tpu.memory_space<smem>>
    %cst_59 = arith.constant 8.000000e+00 : f32
    %158 = arith.mulf %157, %cst_59 : f32
    %159 = vector.broadcast %158 : f32 to vector<16x32xf32>
    %160 = arith.addf %28, %159 : vector<16x32xf32>
    %cst_60 = arith.constant 0.000000e+00 : f32
    %cst_61 = arith.constant 1.000000e+00 : f32
    %161 = vector.broadcast %cst_60 : f32 to vector<16x32xf32>
    %162 = arith.maximumf %161, %160 : vector<16x32xf32>
    %163 = vector.broadcast %cst_61 : f32 to vector<16x32xf32>
    %164 = arith.minimumf %163, %162 : vector<16x32xf32>
    %165 = arith.mulf %156, %164 : vector<16x32xf32>
    %cst_62 = arith.constant dense<0.000000e+00> : vector<16xf32>
    %166 = vector.multi_reduction <add>, %165, %cst_62 [1] : vector<16x32xf32> to vector<16xf32>
    %167 = vector.shape_cast %166 : vector<16xf32> to vector<16x1xf32>
    %cst_63 = arith.constant dense<0.000000e+00> : vector<16xf32>
    %168 = vector.multi_reduction <add>, %156, %cst_63 [1] : vector<16x32xf32> to vector<16xf32>
    %169 = vector.shape_cast %168 : vector<16xf32> to vector<16x1xf32>
    %cst_64 = arith.constant 9.99999993E-9 : f32
    %170 = vector.broadcast %cst_64 : f32 to vector<16x1xf32>
    %171 = arith.mulf %170, %169 : vector<16x1xf32>
    %172 = arith.addf %167, %171 : vector<16x1xf32>
    %cst_65 = arith.constant 0.000000e+00 : f32
    %173 = vector.broadcast %cst_65 : f32 to vector<16x1xf32>
    %174 = arith.cmpf ogt, %172, %173 : vector<16x1xf32>
    %175 = tpu.reciprocal %172 : vector<16x1xf32> -> vector<16x1xf32>
    %cst_66 = arith.constant 0.000000e+00 : f32
    %176 = vector.broadcast %cst_66 : f32 to vector<16x1xf32>
    %177 = arith.select %174, %175, %176 : vector<16x1xi1>, vector<16x1xf32>
    %178 = vector.broadcast %177 : vector<16x1xf32> to vector<16x32xf32>
    %179 = arith.mulf %165, %178 : vector<16x32xf32>
    %180 = vector.extract_strided_slice %36 {offsets = [0, 24], sizes = [32, 8], strides = [1, 1]} : vector<32x32xf32> to vector<32x8xf32>
    %cst_67 = arith.constant dense<0.000000e+00> : vector<16x8xf32>
    %181 = tpu.matmul %179, %180, %cst_67 {dimension_numbers = #tpu.dot_dimension_numbers<[1], [0], [0], [1], [0, 0, 1, 1], [], []>} : vector<16x32xf32>, vector<32x8xf32>, vector<16x8xf32> -> vector<16x8xf32>
    %c0_68 = arith.constant 0 : index
    %c0_69 = arith.constant 0 : index
    %c24 = arith.constant 24 : index
    %182 = vector.load %arg8[%c0_68, %c0_69, %c24] : memref<1x16x32xf32, #tpu.memory_space<vmem>>, vector<1x16x8xf32>
    %183 = vector.shape_cast %182 : vector<1x16x8xf32> to vector<16x8xf32>
    %184 = vector.shape_cast %181 : vector<16x8xf32> to vector<1x16x8xf32>
    tpu.vector_store %arg8[%c0_68, %c0_69, %c24], %184 {strides = array<i32>} : memref<1x16x32xf32, #tpu.memory_space<vmem>>, vector<1x16x8xf32>,
    return
  }
  func.func @transform_0(%arg0: i32, %arg1: i32, %arg2: memref<2xi32, #tpu.memory_space<smem>>, %arg3: memref<4xf32, #tpu.memory_space<smem>>) -> (i32, i32, i32) {
    %c0_i32 = arith.constant 0 : i32
    %c0_i32_0 = arith.constant 0 : i32
    %c0_i32_1 = arith.constant 0 : i32
    return %arg0, %c0_i32, %c0_i32_0 : i32, i32, i32
  }
  func.func @transform_1(%arg0: i32, %arg1: i32, %arg2: memref<2xi32, #tpu.memory_space<smem>>, %arg3: memref<4xf32, #tpu.memory_space<smem>>) -> (i32, i32, i32) {
    %c0_i32 = arith.constant 0 : i32
    %c0_i32_0 = arith.constant 0 : i32
    return %arg0, %arg1, %c0_i32 : i32, i32, i32
  }
  func.func @transform_2(%arg0: i32, %arg1: i32, %arg2: memref<2xi32, #tpu.memory_space<smem>>, %arg3: memref<4xf32, #tpu.memory_space<smem>>) -> (i32, i32, i32) {
    %c0_i32 = arith.constant 0 : i32
    %c0_i32_0 = arith.constant 0 : i32
    %c0_i32_1 = arith.constant 0 : i32
    return %arg0, %c0_i32, %c0_i32_0 : i32, i32, i32
  }
  func.func @transform_3(%arg0: i32, %arg1: i32, %arg2: memref<2xi32, #tpu.memory_space<smem>>, %arg3: memref<4xf32, #tpu.memory_space<smem>>) -> (i32, i32, i32) {
    %c0_i32 = arith.constant 0 : i32
    %c0_i32_0 = arith.constant 0 : i32
    %c0_i32_1 = arith.constant 0 : i32
    return %arg0, %c0_i32, %c0_i32_0 : i32, i32, i32
  }
  func.func @transform_4(%arg0: i32, %arg1: i32, %arg2: memref<2xi32, #tpu.memory_space<smem>>, %arg3: memref<4xf32, #tpu.memory_space<smem>>) -> (i32, i32, i32) {
    %c0_i32 = arith.constant 0 : i32
    %c0_i32_0 = arith.constant 0 : i32
    return %arg0, %arg1, %c0_i32 : i32, i32, i32
  }
}

</mosaic_0001>

<llo_original>
// kernel: _core.1
$region0: #{_core.1}
  #allocation0 [shape = 'u32[]', space=smem, size = 0x4, offset = 0x4, fixed_abs, tag = 'smem constant byte address 0x4 - core index']
  #allocation1 [shape = 'u32[144,128]{1,0:T(1,128)}', space=vmem, size = 0x12000, scoped, tag = 'internal scratch']
  #allocation2 [shape = 's32[1]{0}', space=sflag, size = 0x4, scoped, tag = 'scoped memory for _core.1']
  #allocation3 [shape = 'u8[512]{0}', space=smem, size = 0x200, scoped, tag = 'prefetched SMEM operand 0']
  #allocation4 [shape = 'u8[512]{0}', space=smem, size = 0x200, scoped, tag = 'prefetched SMEM operand 1']
  %s0 = inlined_call_operand.vmem [shape: s32[2], index: 0, kind: input, shape index: {}]
  %s1 = inlined_call_operand.vmem [shape: f32[4], index: 1, kind: input, shape index: {}]
  %s2 = inlined_call_operand.vmem [shape: s32[2,1,32], index: 2, kind: input, shape index: {}]
  %s3 = inlined_call_operand.vmem [shape: f32[2,32,32], index: 3, kind: input, shape index: {}]
  %s4 = inlined_call_operand.vmem [shape: f32[2,32,32], index: 4, kind: input, shape index: {}]
  %s5 = inlined_call_operand.vmem [shape: f32[2,32,32], index: 5, kind: input, shape index: {}]
  %s6 = inlined_call_operand.vmem [shape: f32[2,32,32], index: 6, kind: output, shape index: {}]
  %s7 = sld [smem:[#allocation0]]
  $region49: #{_core.1} parent=0
    _
  %s9 = ssub.s32 1, %s7
  %s10 = scalar_select 0, %s9, %s7
  %s11 = sshll.u32 %s0, 4
  %s12 = int_to_ptr.vmem [resolvable:$true] %s11
  %14 = dma.vmem_to_smem %s12, 16, [#allocation3], [#allocation2]
  %s15 = sshll.u32 %s1, 4
  %s16 = int_to_ptr.vmem [resolvable:$true] %s15
  %18 = dma.vmem_to_smem %s16, 16, [#allocation4], [#allocation2]
  %19 = dma.done [#allocation2], 32
  %20 = sfence
  loop: start=0, step=1, limit=6
  $region2: #{_core.1} parent=0 // loop_pre_header
    _
  $region3: #{_core.1} parent=0 // loop_header
    %s22 = sphi 0, %s26
    %p23 = scmp.ge.s32.totalorder %s22, 6
    %s29 = sphi 0, %s41
    %s30 = sphi 0, %s37
    %s31 = sphi 0, %s29
    %s32 = sphi 0, %s30
    %s33 = sphi 0, %s31
    %s34 = sphi 0, %s32
    %s44 = sphi 0, %s46
    %s47 = sphi 0, %s44
    %s48 = sphi 0, %s47
    %s64 = sphi 0, %s48
    %s72 = sphi 0, %s74
    %s75 = sphi 0, %s72
    %s76 = sphi 0, %s75
    %s92 = sphi 0, %s76
    %s98 = sphi 0, %s100
    %s101 = sphi 0, %s98
    %s102 = sphi 0, %s101
    %s118 = sphi 0, %s102
    %s124 = sphi 0, %s126
    %s127 = sphi 0, %s124
    %s128 = sphi 0, %s127
    %s144 = sphi 0, %s128
    %s152 = sphi 0, %s154
    %s155 = sphi 0, %s152
    %s156 = sphi 0, %s155
    %s172 = sphi 0, %s156
  $region4: #{_core.1} parent=0 // loop_header_branch
    %25 = sbr.rel (%p23) target = $region8
  $region5: #{_core.1} parent=0 // loop_body
    %s27 = ssub.s32 %s22, 1
    %s28 = ssub.s32 %s22, 2
    %s35 = sadd.s32 1, %s30
    %p36 = scmp.ge.s32.totalorder %s35, 2
    %s37 = scalar_select %p36, 0, %s35
    %s38 = sadd.s32 1, %s29
    %s39 = scalar_select %p36, %s38, %s29
    %p40 = scmp.ge.s32.totalorder %s39, 2
    %s41 = scalar_select %p40, 0, %s39
    %s42 = ssub.s32 %s29, %s41
    %p43 = scmp.eq.s32.totalorder %s42, 0
    %s45 = sadd.s32 %s44, 1
    %s46 = scalar_select %p43, %s44, %s45
    %p49 = pneg %p43
    %p50 = scmp.eq.s32.totalorder %s22, 3
    %p51 = por %p49, %p50
    %p52 = scmp.ne.s32.totalorder %s44, %s47
    %p53 = scmp.eq.s32.totalorder %s22, 0
    %p54 = por %p52, %p53
    %p55 = scmp.ne.s32.totalorder %s44, %s47
    %p56 = scmp.eq.s32.totalorder %s27, 3
    %p57 = por %p55, %p56
    %p58 = scmp.ne.s32.totalorder %s47, %s48
    %p59 = scmp.eq.s32.totalorder %s27, 0
    %p60 = por %p58, %p59
    %p61 = scmp.ne.s32.totalorder %s47, %s48
    %p62 = scmp.eq.s32.totalorder %s28, 3
    %p63 = por %p61, %p62
    %p65 = scmp.ne.s32.totalorder %s48, %s64
    %p66 = scmp.eq.s32.totalorder %s28, 0
    %p67 = por %p65, %p66
    %s68 = ssub.s32 %s29, %s41
    %s69 = ssub.s32 %s30, %s37
    %s70 = sor.u32 %s68, %s69
    %p71 = scmp.eq.s32.totalorder %s70, 0
    %s73 = sadd.s32 %s72, 1
    %s74 = scalar_select %p71, %s72, %s73
    %p77 = pneg %p71
    %p78 = scmp.eq.s32.totalorder %s22, 3
    %p79 = por %p77, %p78
    %p80 = scmp.ne.s32.totalorder %s72, %s75
    %p81 = scmp.eq.s32.totalorder %s22, 0
    %p82 = por %p80, %p81
    %p83 = scmp.ne.s32.totalorder %s72, %s75
    %p84 = scmp.eq.s32.totalorder %s27, 3
    %p85 = por %p83, %p84
    %p86 = scmp.ne.s32.totalorder %s75, %s76
    %p87 = scmp.eq.s32.totalorder %s27, 0
    %p88 = por %p86, %p87
    %p89 = scmp.ne.s32.totalorder %s75, %s76
    %p90 = scmp.eq.s32.totalorder %s28, 3
    %p91 = por %p89, %p90
    %p93 = scmp.ne.s32.totalorder %s76, %s92
    %p94 = scmp.eq.s32.totalorder %s28, 0
    %p95 = por %p93, %p94
    %s96 = ssub.s32 %s29, %s41
    %p97 = scmp.eq.s32.totalorder %s96, 0
    %s99 = sadd.s32 %s98, 1
    %s100 = scalar_select %p97, %s98, %s99
    %p103 = pneg %p97
    %p104 = scmp.eq.s32.totalorder %s22, 3
    %p105 = por %p103, %p104
    %p106 = scmp.ne.s32.totalorder %s98, %s101
    %p107 = scmp.eq.s32.totalorder %s22, 0
    %p108 = por %p106, %p107
    %p109 = scmp.ne.s32.totalorder %s98, %s101
    %p110 = scmp.eq.s32.totalorder %s27, 3
    %p111 = por %p109, %p110
    %p112 = scmp.ne.s32.totalorder %s101, %s102
    %p113 = scmp.eq.s32.totalorder %s27, 0
    %p114 = por %p112, %p113
    %p115 = scmp.ne.s32.totalorder %s101, %s102
    %p116 = scmp.eq.s32.totalorder %s28, 3
    %p117 = por %p115, %p116
    %p119 = scmp.ne.s32.totalorder %s102, %s118
    %p120 = scmp.eq.s32.totalorder %s28, 0
    %p121 = por %p119, %p120
    %s122 = ssub.s32 %s29, %s41
    %p123 = scmp.eq.s32.totalorder %s122, 0
    %s125 = sadd.s32 %s124, 1
    %s126 = scalar_select %p123, %s124, %s125
    %p129 = pneg %p123
    %p130 = scmp.eq.s32.totalorder %s22, 3
    %p131 = por %p129, %p130
    %p132 = scmp.ne.s32.totalorder %s124, %s127
    %p133 = scmp.eq.s32.totalorder %s22, 0
    %p134 = por %p132, %p133
    %p135 = scmp.ne.s32.totalorder %s124, %s127
    %p136 = scmp.eq.s32.totalorder %s27, 3
    %p137 = por %p135, %p136
    %p138 = scmp.ne.s32.totalorder %s127, %s128
    %p139 = scmp.eq.s32.totalorder %s27, 0
    %p140 = por %p138, %p139
    %p141 = scmp.ne.s32.totalorder %s127, %s128
    %p142 = scmp.eq.s32.totalorder %s28, 3
    %p143 = por %p141, %p142
    %p145 = scmp.ne.s32.totalorder %s128, %s144
    %p146 = scmp.eq.s32.totalorder %s28, 0
    %p147 = por %p145, %p146
    %s148 = ssub.s32 %s29, %s41
    %s149 = ssub.s32 %s30, %s37
    %s150 = sor.u32 %s148, %s149
    %p151 = scmp.eq.s32.totalorder %s150, 0
    %s153 = sadd.s32 %s152, 1
    %s154 = scalar_select %p151, %s152, %s153
    %p157 = pneg %p151
    %p158 = scmp.eq.s32.totalorder %s22, 3
    %p159 = por %p157, %p158
    %p160 = scmp.ne.s32.totalorder %s152, %s155
    %p161 = scmp.eq.s32.totalorder %s22, 0
    %p162 = por %p160, %p161
    %p163 = scmp.ne.s32.totalorder %s152, %s155
    %p164 = scmp.eq.s32.totalorder %s27, 3
    %p165 = por %p163, %p164
    %p166 = scmp.ne.s32.totalorder %s155, %s156
    %p167 = scmp.eq.s32.totalorder %s27, 0
    %p168 = por %p166, %p167
    %p169 = scmp.ne.s32.totalorder %s155, %s156
    %p170 = scmp.eq.s32.totalorder %s28, 3
    %p171 = por %p169, %p170
    %p173 = scmp.ne.s32.totalorder %s156, %s172
    %p174 = scmp.eq.s32.totalorder %s28, 0
    %p175 = por %p173, %p174
    %p176 = scmp.le.s32.totalorder 1, %s22
    %p177 = scmp.lt.s32.totalorder %s22, 5
    %p178 = pnand %p176, %p177
    %p179 = pneg %p178
    // Predicated region
    $region9: #{_core.1} parent=5 // pred_check
      _
    $region10: #{_core.1} parent=5 // pred_check_branch
      %181 = sbr.rel (%p178) target = $region12
    $region11: #{_core.1} parent=5 // pred_region
      %s182 = ssub.s32 %s22, 1
    $region12: #{_core.1} parent=5 // pred_fallthru
      _
    %p183 = scmp.lt.s32.totalorder %s22, 4
    // Predicated region
    $region13: #{_core.1} parent=5 // pred_check
      %p184 = pneg %p183
    $region14: #{_core.1} parent=5 // pred_check_branch
      %186 = sbr.rel (%p184) target = $region16
    $region15: #{_core.1} parent=5 // pred_region
      // Predicated region
      $region17: #{_core.1} parent=15 // pred_check
        %p187 = pneg %p54
      $region18: #{_core.1} parent=15 // pred_check_branch
        %189 = sbr.rel (%p187) target = $region20
      $region19: #{_core.1} parent=15 // pred_region
        %p190 = scmp.lt.s32.totalorder %s29, 1
        %s191 = scalar_select %p190, %s29, 1
        %s192 = scalar_lea.vmem %s2, %s191
      $region20: #{_core.1} parent=15 // pred_fallthru
        _
      // Predicated region
      $region21: #{_core.1} parent=15 // pred_check
        %p193 = pneg %p82
      $region22: #{_core.1} parent=15 // pred_check_branch
        %195 = sbr.rel (%p193) target = $region24
      $region23: #{_core.1} parent=15 // pred_region
        %s196 = smul.u32 2, %s30
        %p197 = scmp.lt.s32.totalorder %s29, 1
        %s198 = scalar_select %p197, %s29, 1
        %p199 = scmp.lt.s32.totalorder %s196, 3
        %s200 = scalar_select %p199, %s196, 3
        %s201 = smul.addr %s198, 4
        %s202 = sadd.s32 %s200, %s201
        %s203 = smul.addr %s202, 8
        %s204 = scalar_lea.vmem %s3, %s203
        %s205 = smul.u32 2, %s30
      $region24: #{_core.1} parent=15 // pred_fallthru
        _
      // Predicated region
      $region25: #{_core.1} parent=15 // pred_check
        %p206 = pneg %p108
      $region26: #{_core.1} parent=15 // pred_check_branch
        %208 = sbr.rel (%p206) target = $region28
      $region27: #{_core.1} parent=15 // pred_region
        %p209 = scmp.lt.s32.totalorder %s29, 1
        %s210 = scalar_select %p209, %s29, 1
        %s211 = smul.addr %s210, 4
        %s212 = smul.addr %s211, 8
        %s213 = scalar_lea.vmem %s4, %s212
      $region28: #{_core.1} parent=15 // pred_fallthru
        _
      // Predicated region
      $region29: #{_core.1} parent=15 // pred_check
        %p214 = pneg %p134
      $region30: #{_core.1} parent=15 // pred_check_branch
        %216 = sbr.rel (%p214) target = $region32
      $region31: #{_core.1} parent=15 // pred_region
        %p217 = scmp.lt.s32.totalorder %s29, 1
        %s218 = scalar_select %p217, %s29, 1
        %s219 = smul.addr %s218, 4
        %s220 = smul.addr %s219, 8
        %s221 = scalar_lea.vmem %s5, %s220
      $region32: #{_core.1} parent=15 // pred_fallthru
        _
    $region16: #{_core.1} parent=5 // pred_fallthru
      _
    %p222 = scmp.le.s32.totalorder 1, %s22
    %p223 = scmp.lt.s32.totalorder %s22, 5
    %p224 = pnand %p222, %p223
    %p225 = pneg %p224
    // Predicated region
    $region33: #{_core.1} parent=5 // pred_check
      _
    $region34: #{_core.1} parent=5 // pred_check_branch
      %227 = sbr.rel (%p224) target = $region36
    $region35: #{_core.1} parent=5 // pred_region
      %s228 = ssub.s32 %s22, 1
      %p229 = scmp.lt.s32.totalorder %s31, 1
      %s230 = scalar_select %p229, %s31, 1
      %s231 = scalar_lea.vmem %s2, %s230
      %p232 = pneg %p60
      %p233 = pneg %p57
      %s234 = smul.u32 2, %s32
      %p235 = scmp.lt.s32.totalorder %s31, 1
      %s236 = scalar_select %p235, %s31, 1
      %p237 = scmp.lt.s32.totalorder %s234, 3
      %s238 = scalar_select %p237, %s234, 3
      %s239 = smul.addr %s236, 4
      %s240 = sadd.s32 %s238, %s239
      %s241 = smul.addr %s240, 8
      %s242 = scalar_lea.vmem %s3, %s241
      %p243 = pneg %p88
      %p244 = pneg %p85
      %p245 = scmp.lt.s32.totalorder %s31, 1
      %s246 = scalar_select %p245, %s31, 1
      %s247 = smul.addr %s246, 4
      %s248 = smul.addr %s247, 8
      %s249 = scalar_lea.vmem %s4, %s248
      %p250 = pneg %p114
      %p251 = pneg %p111
      %p252 = scmp.lt.s32.totalorder %s31, 1
      %s253 = scalar_select %p252, %s31, 1
      %s254 = smul.addr %s253, 4
      %s255 = smul.addr %s254, 8
      %s256 = scalar_lea.vmem %s5, %s255
      %p257 = pneg %p140
      %p258 = pneg %p137
      %p259 = pneg %p168
      %p260 = pneg %p165
      %s261 = smul.u32 2, %s32
      %p262 = scmp.lt.s32.totalorder %s31, 1
      %s263 = scalar_select %p262, %s31, 1
      %p264 = scmp.lt.s32.totalorder %s261, 3
      %s265 = scalar_select %p264, %s261, 3
      %s266 = smul.addr %s263, 4
      %s267 = sadd.s32 %s265, %s266
      %s268 = smul.addr %s267, 8
      %s269 = scalar_lea.vmem %s6, %s268
      %p270 = scmp.lt.s32.totalorder %s31, 1
      %s271 = scalar_select %p270, %s31, 1
      %s272 = scalar_lea.vmem %s2, %s271
      %s273 = smul.u32 2, %s32
      %p274 = scmp.lt.s32.totalorder %s31, 1
      %s275 = scalar_select %p274, %s31, 1
      %p276 = scmp.lt.s32.totalorder %s273, 3
      %s277 = scalar_select %p276, %s273, 3
      %s278 = smul.addr %s275, 4
      %s279 = sadd.s32 %s277, %s278
      %s280 = smul.addr %s279, 8
      %s281 = scalar_lea.vmem %s3, %s280
      %s282 = smul.u32 2, %s32
      %p283 = scmp.lt.s32.totalorder %s31, 1
      %s284 = scalar_select %p283, %s31, 1
      %s285 = smul.addr %s284, 4
      %s286 = smul.addr %s285, 8
      %s287 = scalar_lea.vmem %s4, %s286
      %p288 = scmp.lt.s32.totalorder %s31, 1
      %s289 = scalar_select %p288, %s31, 1
      %s290 = smul.addr %s289, 4
      %s291 = smul.addr %s290, 8
      %s292 = scalar_lea.vmem %s5, %s291
      %s293 = smul.u32 2, %s32
      %p294 = scmp.lt.s32.totalorder %s31, 1
      %s295 = scalar_select %p294, %s31, 1
      %p296 = scmp.lt.s32.totalorder %s293, 3
      %s297 = scalar_select %p296, %s293, 3
      %s298 = smul.addr %s295, 4
      %s299 = sadd.s32 %s297, %s298
      %s300 = smul.addr %s299, 8
      %s301 = scalar_lea.vmem %s6, %s300
      %s302 = smul.u32 2, %s32
      %s303 = sld [smem:[#allocation3]]
      %s304 = sld [smem:[#allocation3 + $0x1]]
      %s305 = smul.u32 %s32, 16
      %v306 = vlaneseq
      %v307 = vshrl.u32 %v306, 7
      %v308 = vadd.s32 %v307, 8
      %v309 = vstv %s305
      %v310 = vadd.s32 %v309, %v307
      %v311 = vadd.s32 %v309, %v308
      %v312 = vlaneseq
      %v313 = vand.u32 %v312, 127
      %v314 = vsub.s32 %v313, %v310
      %v315 = vsub.s32 %v313, %v311
      %v316 = vld [vmem:[%s272] sm:$0x1]
      %vm317 = vcmp.ne.s32.totalorder %v316, 0
      %s318 = ssub.s32 0, %s303
      %v319 = vstv %s318
      %vm320 = vcmp.ge.s32.totalorder %v314, %v319
      %vm321 = vcmp.ge.s32.totalorder %v315, %v319
      %v322 = vstv %s304
      %vm323 = vcmp.le.s32.totalorder %v314, %v322
      %vm324 = vcmp.le.s32.totalorder %v315, %v322
      %vm325 = vmand %vm320, %vm323
      %vm326 = vmand %vm321, %vm324
      %v327 = vsel %vm317, 1, 0
      %v328 = vlaneseq
      %v329 = vshrl.u32 %v328, 7
      %v330 = vsub.s32 0, %v329
      %v331 = vrot.slane %v327, %v330
      %vm332 = vcmp.eq.s32.totalorder %v331, 1
      %vm333 = vmand %vm325, %vm332
      %vm334 = vmand %vm326, %vm332
      %v335 = vsel %vm333, 1, 0
      %v336 = vsel %vm334, 1, 0
      %v337 = vcvt.s32.f32 %v335
      %v338 = vcvt.s32.f32 %v336
      %v339 = vcvt.s32.f32 %v314
      %v340 = vcvt.s32.f32 %v315
      %s341 = scvt.s32.f32 %s304
      %s342 = ssub.f32 2.0, %s341
      %v343 = vstv %s342
      %v344 = vadd.f32 %v339, %v343
      %v345 = vadd.f32 %v340, %v343
      %v346 = vmul.f32 %v344, 0.5
      %v347 = vmul.f32 %v345, 0.5
      %v348 = vld [vmem:[%s281] sm:$0xff]
      %v349 = vld [vmem:[%s281 + $0x8] sm:$0xff]
      %v350 = vmul.f32 %v348, 0.35355338
      %v351 = vmul.f32 %v349, 0.35355338
      %v352 = vld [vmem:[%s287] sm:$0xff]
      %v353 = vld [vmem:[%s287 + $0x8] sm:$0xff]
      %v354 = vld [vmem:[%s287 + $0x10] sm:$0xff]
      %v355 = vld [vmem:[%s287 + $0x18] sm:$0xff]
      %v356 = vld [vmem:[%s292] sm:$0xff]
      %v357 = vld [vmem:[%s292 + $0x8] sm:$0xff]
      %v358 = vld [vmem:[%s292 + $0x10] sm:$0xff]
      %v359 = vld [vmem:[%s292 + $0x18] sm:$0xff]
      %vm360 = vcmask 64512
      %v362 = vsel %vm360, %v350, 0
      %v365 = vsel %vm360, %v351, 0
      %v368 = vsel %vm360, %v352, 0
      %v371 = vsel %vm360, %v353, 0
      %v374 = vsel %vm360, %v354, 0
      %v377 = vsel %vm360, %v355, 0
      %379 = vmatprep.subr.mxu0 0.0
      %380 = vmatpush1.xpose.msra.mxu0 0.0
      %381 = vmatprep.subr.mxu0 0.0
      %382 = vmatpush1.xpose.msra.mxu0 0.0
      %383 = vmatprep.subr.mxu0 0.0
      %384 = vmatpush1.xpose.msra.mxu0 0.0
      %385 = vmatprep.subr.mxu0 0.0
      %386 = vmatpush1.xpose.msra.mxu0 0.0
      %387 = vmatprep.subr.mxu0 0.0
      %388 = vmatpush1.xpose.msra.mxu0 0.0
      %389 = vmatprep.subr.mxu0 0.0
      %390 = vmatpush1.xpose.msra.mxu0 0.0
      %391 = vmatprep.subr.mxu0 0.0
      %392 = vmatpush1.xpose.msra.mxu0 0.0
      %393 = vmatprep.subr.mxu0 0.0
      %394 = vmatpush1.xpose.msra.mxu0 0.0
      %395 = vmatprep.subr.mxu0 0.0
      %396 = vmatpush1.xpose.msra.mxu0 0.0
      %397 = vmatprep.subr.mxu0 0.0
      %398 = vmatpush1.xpose.msra.mxu0 0.0
      %399 = vmatprep.subr.mxu0 0.0
      %400 = vmatpush1.xpose.msra.mxu0 0.0
      %401 = vmatprep.subr.mxu0 0.0
      %402 = vmatpush1.xpose.msra.mxu0 0.0
      %403 = vmatprep.subr.mxu0 0.0
      %404 = vmatpush1.xpose.msra.mxu0 %v377
      %405 = vmatprep.subr.mxu0 0.0
      %406 = vmatpush1.xpose.msra.mxu0 %v374
      %407 = vmatprep.subr.mxu0 0.0
      %408 = vmatpush1.xpose.msra.mxu0 %v371
      %409 = vmatprep.subr.mxu0 0.0
      %410 = vmatpush1.xpose.msra.mxu0 %v368
      %411 = vmatprep.subr.mxu0 0.0
      %412 = vmatpush2.xpose.msra.mxu0 0.0
      %413 = vmatprep.subr.mxu0 0.0
      %414 = vmatpush2.xpose.msra.mxu0 0.0
      %415 = vmatprep.subr.mxu0 0.0
      %416 = vmatpush2.xpose.msra.mxu0 0.0
      %417 = vmatprep.subr.mxu0 0.0
      %418 = vmatpush2.xpose.msra.mxu0 0.0
      %419 = vmatprep.subr.mxu0 0.0
      %420 = vmatpush2.xpose.msra.mxu0 0.0
      %421 = vmatprep.subr.mxu0 0.0
      %422 = vmatpush2.xpose.msra.mxu0 0.0
      %423 = vmatprep.subr.mxu0 0.0
      %424 = vmatpush2.xpose.msra.mxu0 0.0
      %425 = vmatprep.subr.mxu0 0.0
      %426 = vmatpush2.xpose.msra.mxu0 0.0
      %427 = vmatprep.subr.mxu0 0.0
      %428 = vmatpush2.xpose.msra.mxu0 0.0
      %429 = vmatprep.subr.mxu0 0.0
      %430 = vmatpush2.xpose.msra.mxu0 0.0
      %431 = vmatprep.subr.mxu0 0.0
      %432 = vmatpush2.xpose.msra.mxu0 0.0
      %433 = vmatprep.subr.mxu0 0.0
      %434 = vmatpush2.xpose.msra.mxu0 0.0
      %435 = vmatprep.subr.mxu0 0.0
      %436 = vmatpush2.xpose.msra.mxu0 0.0
      %437 = vmatprep.subr.mxu0 0.0
      %438 = vmatpush2.xpose.msra.mxu0 0.0
      %439 = vmatprep.subr.mxu0 0.0
      %440 = vmatpush2.xpose.msra.mxu0 0.0
      %441 = vmatprep.subr.mxu0 0.0
      %442 = vmatpush2.xpose.msra.mxu0 0.0
      %443 = vmatprep.mubr.f32.mxu0 0.0
      %444 = vmatmul.mubr.f32.gmra.mxu0 %v362
      %v445 = vpop.f32.mrf.mxu0
      %v446 = vadd.f32 0.0, %v445
      %v447 = vpop.f32.mrf.mxu0
      %448 = vmatprep.mubr.f32.mxu0 0.0
      %449 = vmatmul.mubr.f32.gmra.mxu0 %v365
      %v450 = vpop.f32.mrf.mxu0
      %v451 = vadd.f32 0.0, %v450
      %v452 = vpop.f32.mrf.mxu0
      %453 = vdwg.mxu0
      %vm454 = vcmask 261120
      %v455 = vsel %vm454, %v446, -inf
      %456 = vmax.xlane.f32.xlu0 %v455
      %v457 = vpop.xlane.xlu0 %456
      %v458 = vsel %vm454, %v451, -inf
      %459 = vmax.xlane.f32.xlu0 %v458
      %v460 = vpop.xlane.xlu0 %459
      %v461 = vsub.f32 %v446, %v457
      %v462 = vsub.f32 %v451, %v460
      %v463 = vmul.f32 %v461, 1.442695
      %v464 = vpow.pop %v463
      %v465 = vmul.f32 %v462, 1.442695
      %v466 = vpow.pop %v465
      %v467 = vmul.f32 %v464, %v337
      %v468 = vmul.f32 %v466, %v338
      %s469 = sld [smem:[#allocation4]]
      %s470 = smul.f32 %s469, 8.0
      %v471 = vstv %s470
      %v472 = vadd.f32 %v346, %v471
      %v473 = vadd.f32 %v347, %v471
      %v474 = vmax.f32 %v472, 0.0
      %v475 = vmax.f32 %v473, 0.0
      %v476 = vmin.f32 %v474, 1.0
      %v477 = vmin.f32 %v475, 1.0
      %v478 = vmul.f32 %v467, %v476
      %v479 = vmul.f32 %v468, %v477
      %v480 = vsel %vm454, %v478, 0.0
      %481 = vadd.xlane.f32.xlu0 %v480
      %v482 = vpop.xlane.xlu0 %481
      %v483 = vsel %vm454, %v479, 0.0
      %484 = vadd.xlane.f32.xlu0 %v483
      %v485 = vpop.xlane.xlu0 %484
      %v486 = vsel %vm454, %v467, 0.0
      %487 = vadd.xlane.f32.xlu0 %v486
      %v488 = vpop.xlane.xlu0 %487
      %v489 = vsel %vm454, %v468, 0.0
      %490 = vadd.xlane.f32.xlu0 %v489
      %v491 = vpop.xlane.xlu0 %490
      %v492 = vmul.f32 %v488, 1e-08
      %v493 = vmul.f32 %v491, 1e-08
      %v494 = vadd.f32 %v482, %v492
      %v495 = vadd.f32 %v485, %v493
      %vm496 = vcmp.gt.f32.partialorder %v494, 0.0
      %vm497 = vcmp.gt.f32.partialorder %v495, 0.0
      %v498 = vrcp.pop %v494
      %v499 = vrcp.pop %v495
      %v500 = vsel %vm496, %v498, 0.0
      %v501 = vsel %vm497, %v499, 0.0
      %v502 = vmul.f32 %v478, %v500
      %v503 = vmul.f32 %v479, %v501
      %v505 = vsel %vm454, %v502, 0
      %v508 = vsel %vm454, %v503, 0
      %510 = vmatprep.subr.mxu0 0.0
      %511 = vmatpush1.msra.mxu0 0.0
      %512 = vmatprep.subr.mxu0 0.0
      %513 = vmatpush1.msra.mxu0 0.0
      %514 = vmatprep.subr.mxu0 0.0
      %515 = vmatpush1.msra.mxu0 0.0
      %516 = vmatprep.subr.mxu0 0.0
      %517 = vmatpush1.msra.mxu0 0.0
      %518 = vmatprep.subr.mxu0 0.0
      %519 = vmatpush1.msra.mxu0 0.0
      %520 = vmatprep.subr.mxu0 0.0
      %521 = vmatpush1.msra.mxu0 0.0
      %522 = vmatprep.subr.mxu0 0.0
      %523 = vmatpush1.msra.mxu0 0.0
      %524 = vmatprep.subr.mxu0 0.0
      %525 = vmatpush1.msra.mxu0 0.0
      %526 = vmatprep.subr.mxu0 0.0
      %527 = vmatpush1.msra.mxu0 0.0
      %528 = vmatprep.subr.mxu0 0.0
      %529 = vmatpush1.msra.mxu0 0.0
      %530 = vmatprep.subr.mxu0 0.0
      %531 = vmatpush1.msra.mxu0 0.0
      %532 = vmatprep.subr.mxu0 0.0
      %533 = vmatpush1.msra.mxu0 0.0
      %534 = vmatprep.subr.mxu0 0.0
      %535 = vmatpush1.msra.mxu0 %v359
      %536 = vmatprep.subr.mxu0 0.0
      %537 = vmatpush1.msra.mxu0 %v358
      %538 = vmatprep.subr.mxu0 0.0
      %539 = vmatpush1.msra.mxu0 %v357
      %540 = vmatprep.subr.mxu0 0.0
      %541 = vmatpush1.msra.mxu0 %v356
      %542 = vmatprep.subr.mxu0 0.0
      %543 = vmatpush2.msra.mxu0 0.0
      %544 = vmatprep.subr.mxu0 0.0
      %545 = vmatpush2.msra.mxu0 0.0
      %546 = vmatprep.subr.mxu0 0.0
      %547 = vmatpush2.msra.mxu0 0.0
      %548 = vmatprep.subr.mxu0 0.0
      %549 = vmatpush2.msra.mxu0 0.0
      %550 = vmatprep.subr.mxu0 0.0
      %551 = vmatpush2.msra.mxu0 0.0
      %552 = vmatprep.subr.mxu0 0.0
      %553 = vmatpush2.msra.mxu0 0.0
      %554 = vmatprep.subr.mxu0 0.0
      %555 = vmatpush2.msra.mxu0 0.0
      %556 = vmatprep.subr.mxu0 0.0
      %557 = vmatpush2.msra.mxu0 0.0
      %558 = vmatprep.subr.mxu0 0.0
      %559 = vmatpush2.msra.mxu0 0.0
      %560 = vmatprep.subr.mxu0 0.0
      %561 = vmatpush2.msra.mxu0 0.0
      %562 = vmatprep.subr.mxu0 0.0
      %563 = vmatpush2.msra.mxu0 0.0
      %564 = vmatprep.subr.mxu0 0.0
      %565 = vmatpush2.msra.mxu0 0.0
      %566 = vmatprep.subr.mxu0 0.0
      %567 = vmatpush2.msra.mxu0 0.0
      %568 = vmatprep.subr.mxu0 0.0
      %569 = vmatpush2.msra.mxu0 0.0
      %570 = vmatprep.subr.mxu0 0.0
      %571 = vmatpush2.msra.mxu0 0.0
      %572 = vmatprep.subr.mxu0 0.0
      %573 = vmatpush2.msra.mxu0 0.0
      %574 = vmatprep.mubr.f32.mxu0 0.0
      %575 = vmatmul.mubr.f32.gmra.mxu0 %v505
      %v576 = vpop.f32.mrf.mxu0
      %v577 = vadd.f32 0.0, %v576
      %v578 = vpop.f32.mrf.mxu0
      %579 = vmatprep.mubr.f32.mxu0 0.0
      %580 = vmatmul.mubr.f32.gmra.mxu0 %v508
      %v581 = vpop.f32.mrf.mxu0
      %v582 = vadd.f32 0.0, %v581
      %v583 = vpop.f32.mrf.mxu0
      %584 = vdwg.mxu0
      %585 = vst.msk [vmem:[%s301] sm:$0xff] %vm360, %v577
      %586 = vst.msk [vmem:[%s301 + $0x8] sm:$0xff] %vm360, %v582
      %587 = vrot.lane.b32.xlu0 %v350, 120
      %v588 = vpop.permute.xlu0 %587
      %589 = vrot.lane.b32.xlu0 %v351, 120
      %v590 = vpop.permute.xlu0 %589
      %591 = vrot.lane.b32.xlu0 %v352, 120
      %v592 = vpop.permute.xlu0 %591
      %593 = vrot.lane.b32.xlu0 %v353, 120
      %v594 = vpop.permute.xlu0 %593
      %595 = vrot.lane.b32.xlu0 %v354, 120
      %v596 = vpop.permute.xlu0 %595
      %597 = vrot.lane.b32.xlu0 %v355, 120
      %v598 = vpop.permute.xlu0 %597
      %v599 = vsel %vm360, %v588, 0
      %v601 = vsel %vm360, %v590, 0
      %v603 = vsel %vm360, %v592, 0
      %v605 = vsel %vm360, %v594, 0
      %v607 = vsel %vm360, %v596, 0
      %v609 = vsel %vm360, %v598, 0
      %611 = vmatprep.subr.mxu0 0.0
      %612 = vmatpush1.xpose.msra.mxu0 0.0
      %613 = vmatprep.subr.mxu0 0.0
      %614 = vmatpush1.xpose.msra.mxu0 0.0
      %615 = vmatprep.subr.mxu0 0.0
      %616 = vmatpush1.xpose.msra.mxu0 0.0
      %617 = vmatprep.subr.mxu0 0.0
      %618 = vmatpush1.xpose.msra.mxu0 0.0
      %619 = vmatprep.subr.mxu0 0.0
      %620 = vmatpush1.xpose.msra.mxu0 0.0
      %621 = vmatprep.subr.mxu0 0.0
      %622 = vmatpush1.xpose.msra.mxu0 0.0
      %623 = vmatprep.subr.mxu0 0.0
      %624 = vmatpush1.xpose.msra.mxu0 0.0
      %625 = vmatprep.subr.mxu0 0.0
      %626 = vmatpush1.xpose.msra.mxu0 0.0
      %627 = vmatprep.subr.mxu0 0.0
      %628 = vmatpush1.xpose.msra.mxu0 0.0
      %629 = vmatprep.subr.mxu0 0.0
      %630 = vmatpush1.xpose.msra.mxu0 0.0
      %631 = vmatprep.subr.mxu0 0.0
      %632 = vmatpush1.xpose.msra.mxu0 0.0
      %633 = vmatprep.subr.mxu0 0.0
      %634 = vmatpush1.xpose.msra.mxu0 0.0
      %635 = vmatprep.subr.mxu0 0.0
      %636 = vmatpush1.xpose.msra.mxu0 %v609
      %637 = vmatprep.subr.mxu0 0.0
      %638 = vmatpush1.xpose.msra.mxu0 %v607
      %639 = vmatprep.subr.mxu0 0.0
      %640 = vmatpush1.xpose.msra.mxu0 %v605
      %641 = vmatprep.subr.mxu0 0.0
      %642 = vmatpush1.xpose.msra.mxu0 %v603
      %643 = vmatprep.subr.mxu0 0.0
      %644 = vmatpush2.xpose.msra.mxu0 0.0
      %645 = vmatprep.subr.mxu0 0.0
      %646 = vmatpush2.xpose.msra.mxu0 0.0
      %647 = vmatprep.subr.mxu0 0.0
      %648 = vmatpush2.xpose.msra.mxu0 0.0
      %649 = vmatprep.subr.mxu0 0.0
      %650 = vmatpush2.xpose.msra.mxu0 0.0
      %651 = vmatprep.subr.mxu0 0.0
      %652 = vmatpush2.xpose.msra.mxu0 0.0
      %653 = vmatprep.subr.mxu0 0.0
      %654 = vmatpush2.xpose.msra.mxu0 0.0
      %655 = vmatprep.subr.mxu0 0.0
      %656 = vmatpush2.xpose.msra.mxu0 0.0
      %657 = vmatprep.subr.mxu0 0.0
      %658 = vmatpush2.xpose.msra.mxu0 0.0
      %659 = vmatprep.subr.mxu0 0.0
      %660 = vmatpush2.xpose.msra.mxu0 0.0
      %661 = vmatprep.subr.mxu0 0.0
      %662 = vmatpush2.xpose.msra.mxu0 0.0
      %663 = vmatprep.subr.mxu0 0.0
      %664 = vmatpush2.xpose.msra.mxu0 0.0
      %665 = vmatprep.subr.mxu0 0.0
      %666 = vmatpush2.xpose.msra.mxu0 0.0
      %667 = vmatprep.subr.mxu0 0.0
      %668 = vmatpush2.xpose.msra.mxu0 0.0
      %669 = vmatprep.subr.mxu0 0.0
      %670 = vmatpush2.xpose.msra.mxu0 0.0
      %671 = vmatprep.subr.mxu0 0.0
      %672 = vmatpush2.xpose.msra.mxu0 0.0
      %673 = vmatprep.subr.mxu0 0.0
      %674 = vmatpush2.xpose.msra.mxu0 0.0
      %675 = vmatprep.mubr.f32.mxu0 0.0
      %676 = vmatmul.mubr.f32.gmra.mxu0 %v599
      %v677 = vpop.f32.mrf.mxu0
      %v678 = vadd.f32 0.0, %v677
      %v679 = vpop.f32.mrf.mxu0
      %680 = vmatprep.mubr.f32.mxu0 0.0
      %681 = vmatmul.mubr.f32.gmra.mxu0 %v601
      %v682 = vpop.f32.mrf.mxu0
      %v683 = vadd.f32 0.0, %v682
      %v684 = vpop.f32.mrf.mxu0
      %685 = vdwg.mxu0
      %v686 = vsel %vm454, %v678, -inf
      %687 = vmax.xlane.f32.xlu0 %v686
      %v688 = vpop.xlane.xlu0 %687
      %v689 = vsel %vm454, %v683, -inf
      %690 = vmax.xlane.f32.xlu0 %v689
      %v691 = vpop.xlane.xlu0 %690
      %v692 = vsub.f32 %v678, %v688
      %v693 = vsub.f32 %v683, %v691
      %v694 = vmul.f32 %v692, 1.442695
      %v695 = vpow.pop %v694
      %v696 = vmul.f32 %v693, 1.442695
      %v697 = vpow.pop %v696
      %v698 = vmul.f32 %v695, %v337
      %v699 = vmul.f32 %v697, %v338
      %s700 = sld [smem:[#allocation4 + $0x1]]
      %s701 = smul.f32 %s700, 8.0
      %v702 = vstv %s701
      %v703 = vadd.f32 %v346, %v702
      %v704 = vadd.f32 %v347, %v702
      %v705 = vmax.f32 %v703, 0.0
      %v706 = vmax.f32 %v704, 0.0
      %v707 = vmin.f32 %v705, 1.0
      %v708 = vmin.f32 %v706, 1.0
      %v709 = vmul.f32 %v698, %v707
      %v710 = vmul.f32 %v699, %v708
      %v711 = vsel %vm454, %v709, 0.0
      %712 = vadd.xlane.f32.xlu0 %v711
      %v713 = vpop.xlane.xlu0 %712
      %v714 = vsel %vm454, %v710, 0.0
      %715 = vadd.xlane.f32.xlu0 %v714
      %v716 = vpop.xlane.xlu0 %715
      %v717 = vsel %vm454, %v698, 0.0
      %718 = vadd.xlane.f32.xlu0 %v717
      %v719 = vpop.xlane.xlu0 %718
      %v720 = vsel %vm454, %v699, 0.0
      %721 = vadd.xlane.f32.xlu0 %v720
      %v722 = vpop.xlane.xlu0 %721
      %v723 = vmul.f32 %v719, 1e-08
      %v724 = vmul.f32 %v722, 1e-08
      %v725 = vadd.f32 %v713, %v723
      %v726 = vadd.f32 %v716, %v724
      %vm727 = vcmp.gt.f32.partialorder %v725, 0.0
      %vm728 = vcmp.gt.f32.partialorder %v726, 0.0
      %v729 = vrcp.pop %v725
      %v730 = vrcp.pop %v726
      %v731 = vsel %vm727, %v729, 0.0
      %v732 = vsel %vm728, %v730, 0.0
      %v733 = vmul.f32 %v709, %v731
      %v734 = vmul.f32 %v710, %v732
      %739 = vrot.lane.b32.xlu0 %v356, 120
      %v740 = vpop.permute.xlu0 %739
      %741 = vrot.lane.b32.xlu0 %v357, 120
      %v742 = vpop.permute.xlu0 %741
      %743 = vrot.lane.b32.xlu0 %v358, 120
      %v744 = vpop.permute.xlu0 %743
      %745 = vrot.lane.b32.xlu0 %v359, 120
      %v746 = vpop.permute.xlu0 %745
      %v752 = vsel %vm454, %v733, 0
      %v755 = vsel %vm454, %v734, 0
      %757 = vmatprep.subr.mxu0 0.0
      %758 = vmatpush1.msra.mxu0 0.0
      %759 = vmatprep.subr.mxu0 0.0
      %760 = vmatpush1.msra.mxu0 0.0
      %761 = vmatprep.subr.mxu0 0.0
      %762 = vmatpush1.msra.mxu0 0.0
      %763 = vmatprep.subr.mxu0 0.0
      %764 = vmatpush1.msra.mxu0 0.0
      %765 = vmatprep.subr.mxu0 0.0
      %766 = vmatpush1.msra.mxu0 0.0
      %767 = vmatprep.subr.mxu0 0.0
      %768 = vmatpush1.msra.mxu0 0.0
      %769 = vmatprep.subr.mxu0 0.0
      %770 = vmatpush1.msra.mxu0 0.0
      %771 = vmatprep.subr.mxu0 0.0
      %772 = vmatpush1.msra.mxu0 0.0
      %773 = vmatprep.subr.mxu0 0.0
      %774 = vmatpush1.msra.mxu0 0.0
      %775 = vmatprep.subr.mxu0 0.0
      %776 = vmatpush1.msra.mxu0 0.0
      %777 = vmatprep.subr.mxu0 0.0
      %778 = vmatpush1.msra.mxu0 0.0
      %779 = vmatprep.subr.mxu0 0.0
      %780 = vmatpush1.msra.mxu0 0.0
      %781 = vmatprep.subr.mxu0 0.0
      %782 = vmatpush1.msra.mxu0 %v746
      %783 = vmatprep.subr.mxu0 0.0
      %784 = vmatpush1.msra.mxu0 %v744
      %785 = vmatprep.subr.mxu0 0.0
      %786 = vmatpush1.msra.mxu0 %v742
      %787 = vmatprep.subr.mxu0 0.0
      %788 = vmatpush1.msra.mxu0 %v740
      %789 = vmatprep.subr.mxu0 0.0
      %790 = vmatpush2.msra.mxu0 0.0
      %791 = vmatprep.subr.mxu0 0.0
      %792 = vmatpush2.msra.mxu0 0.0
      %793 = vmatprep.subr.mxu0 0.0
      %794 = vmatpush2.msra.mxu0 0.0
      %795 = vmatprep.subr.mxu0 0.0
      %796 = vmatpush2.msra.mxu0 0.0
      %797 = vmatprep.subr.mxu0 0.0
      %798 = vmatpush2.msra.mxu0 0.0
      %799 = vmatprep.subr.mxu0 0.0
      %800 = vmatpush2.msra.mxu0 0.0
      %801 = vmatprep.subr.mxu0 0.0
      %802 = vmatpush2.msra.mxu0 0.0
      %803 = vmatprep.subr.mxu0 0.0
      %804 = vmatpush2.msra.mxu0 0.0
      %805 = vmatprep.subr.mxu0 0.0
      %806 = vmatpush2.msra.mxu0 0.0
      %807 = vmatprep.subr.mxu0 0.0
      %808 = vmatpush2.msra.mxu0 0.0
      %809 = vmatprep.subr.mxu0 0.0
      %810 = vmatpush2.msra.mxu0 0.0
      %811 = vmatprep.subr.mxu0 0.0
      %812 = vmatpush2.msra.mxu0 0.0
      %813 = vmatprep.subr.mxu0 0.0
      %814 = vmatpush2.msra.mxu0 0.0
      %815 = vmatprep.subr.mxu0 0.0
      %816 = vmatpush2.msra.mxu0 0.0
      %817 = vmatprep.subr.mxu0 0.0
      %818 = vmatpush2.msra.mxu0 0.0
      %819 = vmatprep.subr.mxu0 0.0
      %820 = vmatpush2.msra.mxu0 0.0
      %821 = vmatprep.mubr.f32.mxu0 0.0
      %822 = vmatmul.mubr.f32.gmra.mxu0 %v752
      %v823 = vpop.f32.mrf.mxu0
      %v824 = vadd.f32 0.0, %v823
      %v825 = vpop.f32.mrf.mxu0
      %826 = vmatprep.mubr.f32.mxu0 0.0
      %827 = vmatmul.mubr.f32.gmra.mxu0 %v755
      %v828 = vpop.f32.mrf.mxu0
      %v829 = vadd.f32 0.0, %v828
      %v830 = vpop.f32.mrf.mxu0
      %831 = vdwg.mxu0
      %834 = vrot.lane.b32.xlu0 %v824, 8
      %v835 = vpop.permute.xlu0 %834
      %836 = vrot.lane.b32.xlu0 %v829, 8
      %v837 = vpop.permute.xlu0 %836
      %vm840 = vcmask 130112
      %841 = vst.msk [vmem:[%s301] sm:$0xff] %vm840, %v835
      %842 = vst.msk [vmem:[%s301 + $0x8] sm:$0xff] %vm840, %v837
      %843 = vrot.lane.b32.xlu0 %v350, 112
      %v844 = vpop.permute.xlu0 %843
      %845 = vrot.lane.b32.xlu0 %v351, 112
      %v846 = vpop.permute.xlu0 %845
      %847 = vrot.lane.b32.xlu0 %v352, 112
      %v848 = vpop.permute.xlu0 %847
      %849 = vrot.lane.b32.xlu0 %v353, 112
      %v850 = vpop.permute.xlu0 %849
      %851 = vrot.lane.b32.xlu0 %v354, 112
      %v852 = vpop.permute.xlu0 %851
      %853 = vrot.lane.b32.xlu0 %v355, 112
      %v854 = vpop.permute.xlu0 %853
      %v855 = vsel %vm360, %v844, 0
      %v857 = vsel %vm360, %v846, 0
      %v859 = vsel %vm360, %v848, 0
      %v861 = vsel %vm360, %v850, 0
      %v863 = vsel %vm360, %v852, 0
      %v865 = vsel %vm360, %v854, 0
      %867 = vmatprep.subr.mxu0 0.0
      %868 = vmatpush1.xpose.msra.mxu0 0.0
      %869 = vmatprep.subr.mxu0 0.0
      %870 = vmatpush1.xpose.msra.mxu0 0.0
      %871 = vmatprep.subr.mxu0 0.0
      %872 = vmatpush1.xpose.msra.mxu0 0.0
      %873 = vmatprep.subr.mxu0 0.0
      %874 = vmatpush1.xpose.msra.mxu0 0.0
      %875 = vmatprep.subr.mxu0 0.0
      %876 = vmatpush1.xpose.msra.mxu0 0.0
      %877 = vmatprep.subr.mxu0 0.0
      %878 = vmatpush1.xpose.msra.mxu0 0.0
      %879 = vmatprep.subr.mxu0 0.0
      %880 = vmatpush1.xpose.msra.mxu0 0.0
      %881 = vmatprep.subr.mxu0 0.0
      %882 = vmatpush1.xpose.msra.mxu0 0.0
      %883 = vmatprep.subr.mxu0 0.0
      %884 = vmatpush1.xpose.msra.mxu0 0.0
      %885 = vmatprep.subr.mxu0 0.0
      %886 = vmatpush1.xpose.msra.mxu0 0.0
      %887 = vmatprep.subr.mxu0 0.0
      %888 = vmatpush1.xpose.msra.mxu0 0.0
      %889 = vmatprep.subr.mxu0 0.0
      %890 = vmatpush1.xpose.msra.mxu0 0.0
      %891 = vmatprep.subr.mxu0 0.0
      %892 = vmatpush1.xpose.msra.mxu0 %v865
      %893 = vmatprep.subr.mxu0 0.0
      %894 = vmatpush1.xpose.msra.mxu0 %v863
      %895 = vmatprep.subr.mxu0 0.0
      %896 = vmatpush1.xpose.msra.mxu0 %v861
      %897 = vmatprep.subr.mxu0 0.0
      %898 = vmatpush1.xpose.msra.mxu0 %v859
      %899 = vmatprep.subr.mxu0 0.0
      %900 = vmatpush2.xpose.msra.mxu0 0.0
      %901 = vmatprep.subr.mxu0 0.0
      %902 = vmatpush2.xpose.msra.mxu0 0.0
      %903 = vmatprep.subr.mxu0 0.0
      %904 = vmatpush2.xpose.msra.mxu0 0.0
      %905 = vmatprep.subr.mxu0 0.0
      %906 = vmatpush2.xpose.msra.mxu0 0.0
      %907 = vmatprep.subr.mxu0 0.0
      %908 = vmatpush2.xpose.msra.mxu0 0.0
      %909 = vmatprep.subr.mxu0 0.0
      %910 = vmatpush2.xpose.msra.mxu0 0.0
      %911 = vmatprep.subr.mxu0 0.0
      %912 = vmatpush2.xpose.msra.mxu0 0.0
      %913 = vmatprep.subr.mxu0 0.0
      %914 = vmatpush2.xpose.msra.mxu0 0.0
      %915 = vmatprep.subr.mxu0 0.0
      %916 = vmatpush2.xpose.msra.mxu0 0.0
      %917 = vmatprep.subr.mxu0 0.0
      %918 = vmatpush2.xpose.msra.mxu0 0.0
      %919 = vmatprep.subr.mxu0 0.0
      %920 = vmatpush2.xpose.msra.mxu0 0.0
      %921 = vmatprep.subr.mxu0 0.0
      %922 = vmatpush2.xpose.msra.mxu0 0.0
      %923 = vmatprep.subr.mxu0 0.0
      %924 = vmatpush2.xpose.msra.mxu0 0.0
      %925 = vmatprep.subr.mxu0 0.0
      %926 = vmatpush2.xpose.msra.mxu0 0.0
      %927 = vmatprep.subr.mxu0 0.0
      %928 = vmatpush2.xpose.msra.mxu0 0.0
      %929 = vmatprep.subr.mxu0 0.0
      %930 = vmatpush2.xpose.msra.mxu0 0.0
      %931 = vmatprep.mubr.f32.mxu0 0.0
      %932 = vmatmul.mubr.f32.gmra.mxu0 %v855
      %v933 = vpop.f32.mrf.mxu0
      %v934 = vadd.f32 0.0, %v933
      %v935 = vpop.f32.mrf.mxu0
      %936 = vmatprep.mubr.f32.mxu0 0.0
      %937 = vmatmul.mubr.f32.gmra.mxu0 %v857
      %v938 = vpop.f32.mrf.mxu0
      %v939 = vadd.f32 0.0, %v938
      %v940 = vpop.f32.mrf.mxu0
      %941 = vdwg.mxu0
      %v942 = vsel %vm454, %v934, -inf
      %943 = vmax.xlane.f32.xlu0 %v942
      %v944 = vpop.xlane.xlu0 %943
      %v945 = vsel %vm454, %v939, -inf
      %946 = vmax.xlane.f32.xlu0 %v945
      %v947 = vpop.xlane.xlu0 %946
      %v948 = vsub.f32 %v934, %v944
      %v949 = vsub.f32 %v939, %v947
      %v950 = vmul.f32 %v948, 1.442695
      %v951 = vpow.pop %v950
      %v952 = vmul.f32 %v949, 1.442695
      %v953 = vpow.pop %v952
      %v954 = vmul.f32 %v951, %v337
      %v955 = vmul.f32 %v953, %v338
      %s956 = sld [smem:[#allocation4 + $0x2]]
      %s957 = smul.f32 %s956, 8.0
      %v958 = vstv %s957
      %v959 = vadd.f32 %v346, %v958
      %v960 = vadd.f32 %v347, %v958
      %v961 = vmax.f32 %v959, 0.0
      %v962 = vmax.f32 %v960, 0.0
      %v963 = vmin.f32 %v961, 1.0
      %v964 = vmin.f32 %v962, 1.0
      %v965 = vmul.f32 %v954, %v963
      %v966 = vmul.f32 %v955, %v964
      %v967 = vsel %vm454, %v965, 0.0
      %968 = vadd.xlane.f32.xlu0 %v967
      %v969 = vpop.xlane.xlu0 %968
      %v970 = vsel %vm454, %v966, 0.0
      %971 = vadd.xlane.f32.xlu0 %v970
      %v972 = vpop.xlane.xlu0 %971
      %v973 = vsel %vm454, %v954, 0.0
      %974 = vadd.xlane.f32.xlu0 %v973
      %v975 = vpop.xlane.xlu0 %974
      %v976 = vsel %vm454, %v955, 0.0
      %977 = vadd.xlane.f32.xlu0 %v976
      %v978 = vpop.xlane.xlu0 %977
      %v979 = vmul.f32 %v975, 1e-08
      %v980 = vmul.f32 %v978, 1e-08
      %v981 = vadd.f32 %v969, %v979
      %v982 = vadd.f32 %v972, %v980
      %vm983 = vcmp.gt.f32.partialorder %v981, 0.0
      %vm984 = vcmp.gt.f32.partialorder %v982, 0.0
      %v985 = vrcp.pop %v981
      %v986 = vrcp.pop %v982
      %v987 = vsel %vm983, %v985, 0.0
      %v988 = vsel %vm984, %v986, 0.0
      %v989 = vmul.f32 %v965, %v987
      %v990 = vmul.f32 %v966, %v988
      %991 = vrot.lane.b32.xlu0 %v356, 112
      %v992 = vpop.permute.xlu0 %991
      %993 = vrot.lane.b32.xlu0 %v357, 112
      %v994 = vpop.permute.xlu0 %993
      %995 = vrot.lane.b32.xlu0 %v358, 112
      %v996 = vpop.permute.xlu0 %995
      %997 = vrot.lane.b32.xlu0 %v359, 112
      %v998 = vpop.permute.xlu0 %997
      %v1004 = vsel %vm454, %v989, 0
      %v1007 = vsel %vm454, %v990, 0
      %1009 = vmatprep.subr.mxu0 0.0
      %1010 = vmatpush1.msra.mxu0 0.0
      %1011 = vmatprep.subr.mxu0 0.0
      %1012 = vmatpush1.msra.mxu0 0.0
      %1013 = vmatprep.subr.mxu0 0.0
      %1014 = vmatpush1.msra.mxu0 0.0
      %1015 = vmatprep.subr.mxu0 0.0
      %1016 = vmatpush1.msra.mxu0 0.0
      %1017 = vmatprep.subr.mxu0 0.0
      %1018 = vmatpush1.msra.mxu0 0.0
      %1019 = vmatprep.subr.mxu0 0.0
      %1020 = vmatpush1.msra.mxu0 0.0
      %1021 = vmatprep.subr.mxu0 0.0
      %1022 = vmatpush1.msra.mxu0 0.0
      %1023 = vmatprep.subr.mxu0 0.0
      %1024 = vmatpush1.msra.mxu0 0.0
      %1025 = vmatprep.subr.mxu0 0.0
      %1026 = vmatpush1.msra.mxu0 0.0
      %1027 = vmatprep.subr.mxu0 0.0
      %1028 = vmatpush1.msra.mxu0 0.0
      %1029 = vmatprep.subr.mxu0 0.0
      %1030 = vmatpush1.msra.mxu0 0.0
      %1031 = vmatprep.subr.mxu0 0.0
      %1032 = vmatpush1.msra.mxu0 0.0
      %1033 = vmatprep.subr.mxu0 0.0
      %1034 = vmatpush1.msra.mxu0 %v998
      %1035 = vmatprep.subr.mxu0 0.0
      %1036 = vmatpush1.msra.mxu0 %v996
      %1037 = vmatprep.subr.mxu0 0.0
      %1038 = vmatpush1.msra.mxu0 %v994
      %1039 = vmatprep.subr.mxu0 0.0
      %1040 = vmatpush1.msra.mxu0 %v992
      %1041 = vmatprep.subr.mxu0 0.0
      %1042 = vmatpush2.msra.mxu0 0.0
      %1043 = vmatprep.subr.mxu0 0.0
      %1044 = vmatpush2.msra.mxu0 0.0
      %1045 = vmatprep.subr.mxu0 0.0
      %1046 = vmatpush2.msra.mxu0 0.0
      %1047 = vmatprep.subr.mxu0 0.0
      %1048 = vmatpush2.msra.mxu0 0.0
      %1049 = vmatprep.subr.mxu0 0.0
      %1050 = vmatpush2.msra.mxu0 0.0
      %1051 = vmatprep.subr.mxu0 0.0
      %1052 = vmatpush2.msra.mxu0 0.0
      %1053 = vmatprep.subr.mxu0 0.0
      %1054 = vmatpush2.msra.mxu0 0.0
      %1055 = vmatprep.subr.mxu0 0.0
      %1056 = vmatpush2.msra.mxu0 0.0
      %1057 = vmatprep.subr.mxu0 0.0
      %1058 = vmatpush2.msra.mxu0 0.0
      %1059 = vmatprep.subr.mxu0 0.0
      %1060 = vmatpush2.msra.mxu0 0.0
      %1061 = vmatprep.subr.mxu0 0.0
      %1062 = vmatpush2.msra.mxu0 0.0
      %1063 = vmatprep.subr.mxu0 0.0
      %1064 = vmatpush2.msra.mxu0 0.0
      %1065 = vmatprep.subr.mxu0 0.0
      %1066 = vmatpush2.msra.mxu0 0.0
      %1067 = vmatprep.subr.mxu0 0.0
      %1068 = vmatpush2.msra.mxu0 0.0
      %1069 = vmatprep.subr.mxu0 0.0
      %1070 = vmatpush2.msra.mxu0 0.0
      %1071 = vmatprep.subr.mxu0 0.0
      %1072 = vmatpush2.msra.mxu0 0.0
      %1073 = vmatprep.mubr.f32.mxu0 0.0
      %1074 = vmatmul.mubr.f32.gmra.mxu0 %v1004
      %v1075 = vpop.f32.mrf.mxu0
      %v1076 = vadd.f32 0.0, %v1075
      %v1077 = vpop.f32.mrf.mxu0
      %1078 = vmatprep.mubr.f32.mxu0 0.0
      %1079 = vmatmul.mubr.f32.gmra.mxu0 %v1007
      %v1080 = vpop.f32.mrf.mxu0
      %v1081 = vadd.f32 0.0, %v1080
      %v1082 = vpop.f32.mrf.mxu0
      %1083 = vdwg.mxu0
      %1086 = vrot.lane.b32.xlu0 %v1076, 16
      %v1087 = vpop.permute.xlu0 %1086
      %1088 = vrot.lane.b32.xlu0 %v1081, 16
      %v1089 = vpop.permute.xlu0 %1088
      %vm1092 = vcmask 195712
      %1093 = vst.msk [vmem:[%s301] sm:$0xff] %vm1092, %v1087
      %1094 = vst.msk [vmem:[%s301 + $0x8] sm:$0xff] %vm1092, %v1089
      %1095 = vrot.lane.b32.xlu0 %v350, 104
      %v1096 = vpop.permute.xlu0 %1095
      %1097 = vrot.lane.b32.xlu0 %v351, 104
      %v1098 = vpop.permute.xlu0 %1097
      %1099 = vrot.lane.b32.xlu0 %v352, 104
      %v1100 = vpop.permute.xlu0 %1099
      %1101 = vrot.lane.b32.xlu0 %v353, 104
      %v1102 = vpop.permute.xlu0 %1101
      %1103 = vrot.lane.b32.xlu0 %v354, 104
      %v1104 = vpop.permute.xlu0 %1103
      %1105 = vrot.lane.b32.xlu0 %v355, 104
      %v1106 = vpop.permute.xlu0 %1105
      %v1107 = vsel %vm360, %v1096, 0
      %v1109 = vsel %vm360, %v1098, 0
      %v1111 = vsel %vm360, %v1100, 0
      %v1113 = vsel %vm360, %v1102, 0
      %v1115 = vsel %vm360, %v1104, 0
      %v1117 = vsel %vm360, %v1106, 0
      %1119 = vmatprep.subr.mxu0 0.0
      %1120 = vmatpush1.xpose.msra.mxu0 0.0
      %1121 = vmatprep.subr.mxu0 0.0
      %1122 = vmatpush1.xpose.msra.mxu0 0.0
      %1123 = vmatprep.subr.mxu0 0.0
      %1124 = vmatpush1.xpose.msra.mxu0 0.0
      %1125 = vmatprep.subr.mxu0 0.0
      %1126 = vmatpush1.xpose.msra.mxu0 0.0
      %1127 = vmatprep.subr.mxu0 0.0
      %1128 = vmatpush1.xpose.msra.mxu0 0.0
      %1129 = vmatprep.subr.mxu0 0.0
      %1130 = vmatpush1.xpose.msra.mxu0 0.0
      %1131 = vmatprep.subr.mxu0 0.0
      %1132 = vmatpush1.xpose.msra.mxu0 0.0
      %1133 = vmatprep.subr.mxu0 0.0
      %1134 = vmatpush1.xpose.msra.mxu0 0.0
      %1135 = vmatprep.subr.mxu0 0.0
      %1136 = vmatpush1.xpose.msra.mxu0 0.0
      %1137 = vmatprep.subr.mxu0 0.0
      %1138 = vmatpush1.xpose.msra.mxu0 0.0
      %1139 = vmatprep.subr.mxu0 0.0
      %1140 = vmatpush1.xpose.msra.mxu0 0.0
      %1141 = vmatprep.subr.mxu0 0.0
      %1142 = vmatpush1.xpose.msra.mxu0 0.0
      %1143 = vmatprep.subr.mxu0 0.0
      %1144 = vmatpush1.xpose.msra.mxu0 %v1117
      %1145 = vmatprep.subr.mxu0 0.0
      %1146 = vmatpush1.xpose.msra.mxu0 %v1115
      %1147 = vmatprep.subr.mxu0 0.0
      %1148 = vmatpush1.xpose.msra.mxu0 %v1113
      %1149 = vmatprep.subr.mxu0 0.0
      %1150 = vmatpush1.xpose.msra.mxu0 %v1111
      %1151 = vmatprep.subr.mxu0 0.0
      %1152 = vmatpush2.xpose.msra.mxu0 0.0
      %1153 = vmatprep.subr.mxu0 0.0
      %1154 = vmatpush2.xpose.msra.mxu0 0.0
      %1155 = vmatprep.subr.mxu0 0.0
      %1156 = vmatpush2.xpose.msra.mxu0 0.0
      %1157 = vmatprep.subr.mxu0 0.0
      %1158 = vmatpush2.xpose.msra.mxu0 0.0
      %1159 = vmatprep.subr.mxu0 0.0
      %1160 = vmatpush2.xpose.msra.mxu0 0.0
      %1161 = vmatprep.subr.mxu0 0.0
      %1162 = vmatpush2.xpose.msra.mxu0 0.0
      %1163 = vmatprep.subr.mxu0 0.0
      %1164 = vmatpush2.xpose.msra.mxu0 0.0
      %1165 = vmatprep.subr.mxu0 0.0
      %1166 = vmatpush2.xpose.msra.mxu0 0.0
      %1167 = vmatprep.subr.mxu0 0.0
      %1168 = vmatpush2.xpose.msra.mxu0 0.0
      %1169 = vmatprep.subr.mxu0 0.0
      %1170 = vmatpush2.xpose.msra.mxu0 0.0
      %1171 = vmatprep.subr.mxu0 0.0
      %1172 = vmatpush2.xpose.msra.mxu0 0.0
      %1173 = vmatprep.subr.mxu0 0.0
      %1174 = vmatpush2.xpose.msra.mxu0 0.0
      %1175 = vmatprep.subr.mxu0 0.0
      %1176 = vmatpush2.xpose.msra.mxu0 0.0
      %1177 = vmatprep.subr.mxu0 0.0
      %1178 = vmatpush2.xpose.msra.mxu0 0.0
      %1179 = vmatprep.subr.mxu0 0.0
      %1180 = vmatpush2.xpose.msra.mxu0 0.0
      %1181 = vmatprep.subr.mxu0 0.0
      %1182 = vmatpush2.xpose.msra.mxu0 0.0
      %1183 = vmatprep.mubr.f32.mxu0 0.0
      %1184 = vmatmul.mubr.f32.gmra.mxu0 %v1107
      %v1185 = vpop.f32.mrf.mxu0
      %v1186 = vadd.f32 0.0, %v1185
      %v1187 = vpop.f32.mrf.mxu0
      %1188 = vmatprep.mubr.f32.mxu0 0.0
      %1189 = vmatmul.mubr.f32.gmra.mxu0 %v1109
      %v1190 = vpop.f32.mrf.mxu0
      %v1191 = vadd.f32 0.0, %v1190
      %v1192 = vpop.f32.mrf.mxu0
      %1193 = vdwg.mxu0
      %v1194 = vsel %vm454, %v1186, -inf
      %1195 = vmax.xlane.f32.xlu0 %v1194
      %v1196 = vpop.xlane.xlu0 %1195
      %v1197 = vsel %vm454, %v1191, -inf
      %1198 = vmax.xlane.f32.xlu0 %v1197
      %v1199 = vpop.xlane.xlu0 %1198
      %v1200 = vsub.f32 %v1186, %v1196
      %v1201 = vsub.f32 %v1191, %v1199
      %v1202 = vmul.f32 %v1200, 1.442695
      %v1203 = vpow.pop %v1202
      %v1204 = vmul.f32 %v1201, 1.442695
      %v1205 = vpow.pop %v1204
      %v1206 = vmul.f32 %v1203, %v337
      %v1207 = vmul.f32 %v1205, %v338
      %s1208 = sld [smem:[#allocation4 + $0x3]]
      %s1209 = smul.f32 %s1208, 8.0
      %v1210 = vstv %s1209
      %v1211 = vadd.f32 %v346, %v1210
      %v1212 = vadd.f32 %v347, %v1210
      %v1213 = vmax.f32 %v1211, 0.0
      %v1214 = vmax.f32 %v1212, 0.0
      %v1215 = vmin.f32 %v1213, 1.0
      %v1216 = vmin.f32 %v1214, 1.0
      %v1217 = vmul.f32 %v1206, %v1215
      %v1218 = vmul.f32 %v1207, %v1216
      %v1219 = vsel %vm454, %v1217, 0.0
      %1220 = vadd.xlane.f32.xlu0 %v1219
      %v1221 = vpop.xlane.xlu0 %1220
      %v1222 = vsel %vm454, %v1218, 0.0
      %1223 = vadd.xlane.f32.xlu0 %v1222
      %v1224 = vpop.xlane.xlu0 %1223
      %v1225 = vsel %vm454, %v1206, 0.0
      %1226 = vadd.xlane.f32.xlu0 %v1225
      %v1227 = vpop.xlane.xlu0 %1226
      %v1228 = vsel %vm454, %v1207, 0.0
      %1229 = vadd.xlane.f32.xlu0 %v1228
      %v1230 = vpop.xlane.xlu0 %1229
      %v1231 = vmul.f32 %v1227, 1e-08
      %v1232 = vmul.f32 %v1230, 1e-08
      %v1233 = vadd.f32 %v1221, %v1231
      %v1234 = vadd.f32 %v1224, %v1232
      %vm1235 = vcmp.gt.f32.partialorder %v1233, 0.0
      %vm1236 = vcmp.gt.f32.partialorder %v1234, 0.0
      %v1237 = vrcp.pop %v1233
      %v1238 = vrcp.pop %v1234
      %v1239 = vsel %vm1235, %v1237, 0.0
      %v1240 = vsel %vm1236, %v1238, 0.0
      %v1241 = vmul.f32 %v1217, %v1239
      %v1242 = vmul.f32 %v1218, %v1240
      %1243 = vrot.lane.b32.xlu0 %v356, 104
      %v1244 = vpop.permute.xlu0 %1243
      %1245 = vrot.lane.b32.xlu0 %v357, 104
      %v1246 = vpop.permute.xlu0 %1245
      %1247 = vrot.lane.b32.xlu0 %v358, 104
      %v1248 = vpop.permute.xlu0 %1247
      %1249 = vrot.lane.b32.xlu0 %v359, 104
      %v1250 = vpop.permute.xlu0 %1249
      %v1256 = vsel %vm454, %v1241, 0
      %v1259 = vsel %vm454, %v1242, 0
      %1261 = vmatprep.subr.mxu0 0.0
      %1262 = vmatpush1.msra.mxu0 0.0
      %1263 = vmatprep.subr.mxu0 0.0
      %1264 = vmatpush1.msra.mxu0 0.0
      %1265 = vmatprep.subr.mxu0 0.0
      %1266 = vmatpush1.msra.mxu0 0.0
      %1267 = vmatprep.subr.mxu0 0.0
      %1268 = vmatpush1.msra.mxu0 0.0
      %1269 = vmatprep.subr.mxu0 0.0
      %1270 = vmatpush1.msra.mxu0 0.0
      %1271 = vmatprep.subr.mxu0 0.0
      %1272 = vmatpush1.msra.mxu0 0.0
      %1273 = vmatprep.subr.mxu0 0.0
      %1274 = vmatpush1.msra.mxu0 0.0
      %1275 = vmatprep.subr.mxu0 0.0
      %1276 = vmatpush1.msra.mxu0 0.0
      %1277 = vmatprep.subr.mxu0 0.0
      %1278 = vmatpush1.msra.mxu0 0.0
      %1279 = vmatprep.subr.mxu0 0.0
      %1280 = vmatpush1.msra.mxu0 0.0
      %1281 = vmatprep.subr.mxu0 0.0
      %1282 = vmatpush1.msra.mxu0 0.0
      %1283 = vmatprep.subr.mxu0 0.0
      %1284 = vmatpush1.msra.mxu0 0.0
      %1285 = vmatprep.subr.mxu0 0.0
      %1286 = vmatpush1.msra.mxu0 %v1250
      %1287 = vmatprep.subr.mxu0 0.0
      %1288 = vmatpush1.msra.mxu0 %v1248
      %1289 = vmatprep.subr.mxu0 0.0
      %1290 = vmatpush1.msra.mxu0 %v1246
      %1291 = vmatprep.subr.mxu0 0.0
      %1292 = vmatpush1.msra.mxu0 %v1244
      %1293 = vmatprep.subr.mxu0 0.0
      %1294 = vmatpush2.msra.mxu0 0.0
      %1295 = vmatprep.subr.mxu0 0.0
      %1296 = vmatpush2.msra.mxu0 0.0
      %1297 = vmatprep.subr.mxu0 0.0
      %1298 = vmatpush2.msra.mxu0 0.0
      %1299 = vmatprep.subr.mxu0 0.0
      %1300 = vmatpush2.msra.mxu0 0.0
      %1301 = vmatprep.subr.mxu0 0.0
      %1302 = vmatpush2.msra.mxu0 0.0
      %1303 = vmatprep.subr.mxu0 0.0
      %1304 = vmatpush2.msra.mxu0 0.0
      %1305 = vmatprep.subr.mxu0 0.0
      %1306 = vmatpush2.msra.mxu0 0.0
      %1307 = vmatprep.subr.mxu0 0.0
      %1308 = vmatpush2.msra.mxu0 0.0
      %1309 = vmatprep.subr.mxu0 0.0
      %1310 = vmatpush2.msra.mxu0 0.0
      %1311 = vmatprep.subr.mxu0 0.0
      %1312 = vmatpush2.msra.mxu0 0.0
      %1313 = vmatprep.subr.mxu0 0.0
      %1314 = vmatpush2.msra.mxu0 0.0
      %1315 = vmatprep.subr.mxu0 0.0
      %1316 = vmatpush2.msra.mxu0 0.0
      %1317 = vmatprep.subr.mxu0 0.0
      %1318 = vmatpush2.msra.mxu0 0.0
      %1319 = vmatprep.subr.mxu0 0.0
      %1320 = vmatpush2.msra.mxu0 0.0
      %1321 = vmatprep.subr.mxu0 0.0
      %1322 = vmatpush2.msra.mxu0 0.0
      %1323 = vmatprep.subr.mxu0 0.0
      %1324 = vmatpush2.msra.mxu0 0.0
      %1325 = vmatprep.mubr.f32.mxu0 0.0
      %1326 = vmatmul.mubr.f32.gmra.mxu0 %v1256
      %v1327 = vpop.f32.mrf.mxu0
      %v1328 = vadd.f32 0.0, %v1327
      %v1329 = vpop.f32.mrf.mxu0
      %1330 = vmatprep.mubr.f32.mxu0 0.0
      %1331 = vmatmul.mubr.f32.gmra.mxu0 %v1259
      %v1332 = vpop.f32.mrf.mxu0
      %v1333 = vadd.f32 0.0, %v1332
      %v1334 = vpop.f32.mrf.mxu0
      %1335 = vdwg.mxu0
      %1338 = vrot.lane.b32.xlu0 %v1328, 24
      %v1339 = vpop.permute.xlu0 %1338
      %1340 = vrot.lane.b32.xlu0 %v1333, 24
      %v1341 = vpop.permute.xlu0 %1340
      %vm1344 = vcmask 261312
      %1345 = vst.msk [vmem:[%s301] sm:$0xff] %vm1344, %v1339
      %1346 = vst.msk [vmem:[%s301 + $0x8] sm:$0xff] %vm1344, %v1341
      %s1347 = smul.u32 2, %s32
      %p1348 = scmp.lt.s32.totalorder %s31, 1
      %s1349 = scalar_select %p1348, %s31, 1
      %p1350 = scmp.lt.s32.totalorder %s1347, 3
      %s1351 = scalar_select %p1350, %s1347, 3
      %s1352 = smul.addr %s1349, 4
      %s1353 = sadd.s32 %s1351, %s1352
      %s1354 = smul.addr %s1353, 8
      %s1355 = scalar_lea.vmem %s6, %s1354
      // Predicated region
      $region37: #{_core.1} parent=35 // pred_check
        %p1356 = pneg %p165
      $region38: #{_core.1} parent=35 // pred_check_branch
        %1358 = sbr.rel (%p1356) target = $region40
      $region39: #{_core.1} parent=35 // pred_region
        %s1359 = smul.u32 2, %s32
      $region40: #{_core.1} parent=35 // pred_fallthru
        _
    $region36: #{_core.1} parent=5 // pred_fallthru
      _
    %p1360 = scmp.le.s32.totalorder 2, %s22
    // Predicated region
    $region41: #{_core.1} parent=5 // pred_check
      %p1361 = pneg %p1360
    $region42: #{_core.1} parent=5 // pred_check_branch
      %1363 = sbr.rel (%p1361) target = $region44
    $region43: #{_core.1} parent=5 // pred_region
      %s1364 = ssub.s32 %s22, 2
      // Predicated region
      $region45: #{_core.1} parent=43 // pred_check
        %p1365 = pneg %p171
      $region46: #{_core.1} parent=43 // pred_check_branch
        %1367 = sbr.rel (%p1365) target = $region48
      $region47: #{_core.1} parent=43 // pred_region
        %s1368 = smul.u32 2, %s34
        %p1369 = scmp.lt.s32.totalorder %s33, 1
        %s1370 = scalar_select %p1369, %s33, 1
        %p1371 = scmp.lt.s32.totalorder %s1368, 3
        %s1372 = scalar_select %p1371, %s1368, 3
        %s1373 = smul.addr %s1370, 4
        %s1374 = sadd.s32 %s1372, %s1373
        %s1375 = smul.addr %s1374, 8
        %s1376 = scalar_lea.vmem %s6, %s1375
      $region48: #{_core.1} parent=43 // pred_fallthru
        _
    $region44: #{_core.1} parent=5 // pred_fallthru
      _
  $region6: #{_core.1} parent=0 // loop_footer
    %s26 = sadd.s32 1, %s22
  $region7: #{_core.1} parent=0 // loop_footer_branch
    %21 = sbr.rel target = $region3
  $region8: #{_core.1} parent=0 // loop_exit
    _

</llo_original>
